<compile_context>
chip_gen: v7x
topology: tpu7x:2x2x1
jax: 0.10.0
libtpu: 0.0.40
codegen_flags: <defaults>
</compile_context>

<pallas_src>
import math
from functools import partial

import jax
import jax.numpy as jnp
from jax.experimental import pallas as pl
from jax.experimental.pallas import tpu as pltpu

_OUT_H, _OUT_W = 16, 10          # fixed interpolate target in the reference module


def _sgn_kernel(x_ref, w_ref, *rest, lens_x, resize):
    """One grid step over a batch tile.

    x_ref / o_ref : (TB, lens_x + 160, C) f32 - tokens on sublanes, channels on lanes.
    w_ref         : (160, C) f32 resident gate (Re(weight) - 1)/4, duplicated over each
                    2x2 (W, C) Haar block.
    r_ref         : (160, a*b) f32 resident bilinear-resize matrix (only when `resize`).
    """
    if resize:
        r_ref, o_ref = rest
    else:
        r_ref = None
        (o_ref,) = rest

    w = w_ref[...]                                    # (N, C)
    N, C = w.shape

    tok = jax.lax.broadcasted_iota(jnp.int32, (N, C), 0)
    lane = jax.lax.broadcasted_iota(jnp.int32, (N, C), 1)
    tok_even = (tok % 2) == 0                         # W-pair parity (W = 10 is even)
    lane_even = (lane % 2) == 0                       # C-pair parity (C is even)

    # Fused pass-through of the leading `z` tokens (replaces the wrapper concat).
    if lens_x > 0:
        o_ref[:, :lens_x, :] = x_ref[:, :lens_x, :]

    r = r_ref[...] if resize else None

    for t in range(x_ref.shape[0]):                   # static unroll over the batch tile
        y = x_ref[t, pl.ds(lens_x, N), :]             # (160, C) spatial tokens
        if resize:
            # Fused bilinear resize (a, b) -> (16, 10): one small resident MXU dot.
            y = jnp.dot(r, y, preferred_element_type=jnp.float32)

        # Channel-pair sum (lane partner +/- 1).
        up_c = pltpu.roll(y, C - 1, axis=1)           # up_c[:, c] = y[:, c + 1]
        dn_c = pltpu.roll(y, 1, axis=1)               # dn_c[:, c] = y[:, c - 1]
        pc = y + jnp.where(lane_even, up_c, dn_c)

        # W-pair sum (token partner +/- 1) -> full 2x2 Haar block sum.
        up_t = pltpu.roll(pc, N - 1, axis=0)          # up_t[q, :] = pc[q + 1, :]
        dn_t = pltpu.roll(pc, 1, axis=0)              # dn_t[q, :] = pc[q - 1, :]
        s = pc + jnp.where(tok_even, up_t, dn_t)

        o_ref[t, pl.ds(lens_x, N), :] = y + w * s


def _multi_core_chip():
    """True on chips where grid steps shard across >= 2 TensorCores (perf-only hint)."""
    try:
        kind = jax.devices()[0].device_kind.lower()
    except Exception:
        return False
    return any(tag in kind for tag in ("v4", "v5p", "v7"))


def _pick_batch_tile(B, T, C):
    """Batch elements per grid step: a divisor of B (no padding / slicing), sized to
    amortize the ~0.35us per-step overhead while keeping the double-buffered in+out
    blocks comfortably inside the scoped-VMEM budget."""
    per_elem = T * C * 4
    cap = max(1, min(16, (12 << 20) // (4 * per_elem)))     # 2 bufs x (in + out)
    # Single-TC chips (v5e/v6e): fewest, largest steps.  Dual-TC (v4/v5p/v7x):
    # keep >= 2 parallel steps so both cores get work.
    want_steps = 2 if (_multi_core_chip() and B >= 2) else 1
    target = max(1, min(cap, pl.cdiv(B, want_steps)))
    tb = 1
    for d in range(1, target + 1):
        if B % d == 0:
            tb = d
    return tb


def _spectral_gating_pallas(x, w_dup, r_mat, lens_x):
    """x: (B, lens_x + 160, C) f32; w_dup: (160, C) f32; r_mat: None or (160, a*b) f32."""
    B, T, C = x.shape
    N = w_dup.shape[0]                                      # 160 gated tokens

    TB = _pick_batch_tile(B, T, C)
    G = B // TB                                             # TB divides B exactly

    in_specs = [
        pl.BlockSpec((TB, T, C), lambda i: (i, 0, 0)),      # x: one batch tile per step
        pl.BlockSpec((N, C), lambda i: (0, 0)),             # gate: resident across steps
    ]
    args = [x, w_dup]
    resize = r_mat is not None
    if resize:
        in_specs.append(pl.BlockSpec(r_mat.shape, lambda i: (0, 0)))   # resident
        args.append(r_mat)

    flops = 6 * B * N * C + (2 * B * N * r_mat.shape[1] * C if resize else 0)
    bytes_accessed = 4 * (2 * B * T * C + N * C + (r_mat.size if resize else 0))

    return pl.pallas_call(
        partial(_sgn_kernel, lens_x=lens_x, resize=resize),
        out_shape=jax.ShapeDtypeStruct((B, T, C), jnp.float32),
        grid_spec=pltpu.PrefetchScalarGridSpec(
            num_scalar_prefetch=0,
            grid=(G,),
            in_specs=in_specs,
            out_specs=pl.BlockSpec((TB, T, C), lambda i: (i, 0, 0)),
        ),
        compiler_params=pltpu.CompilerParams(
            dimension_semantics=("parallel",),
            vmem_limit_bytes=48 * 1024 * 1024,
        ),
        cost_estimate=pl.CostEstimate(
            flops=flops, transcendentals=0, bytes_accessed=bytes_accessed),
    )(*args)


def _bilinear_matrix(out_size, in_size):
    """(out_size, in_size) interpolation matrix matching
    torch.nn.functional.interpolate(mode='bilinear', align_corners=False)."""
    o = jnp.arange(out_size, dtype=jnp.float32)
    src = jnp.maximum((o + 0.5) * (in_size / out_size) - 0.5, 0.0)
    lo = jnp.floor(src)
    lo_i = lo.astype(jnp.int32)
    hi_i = jnp.minimum(lo_i + 1, in_size - 1)
    frac = src - lo
    return (jax.nn.one_hot(lo_i, in_size, dtype=jnp.float32) * (1.0 - frac)[:, None]
            + jax.nn.one_hot(hi_i, in_size, dtype=jnp.float32) * frac[:, None])


def spectral_gating_network_forward(x, lens_x, complex_weight, spatial_size=None):
    """Forward pass of SpectralGatingNetwork.

    x: (B, lens_x + n, C); complex_weight: (h, w//2 + 1, dim, 2) with
    (h, w//2 + 1, dim) == (16, 5, C//2).  Returns (B, lens_x + n, C) float32.
    """
    B, T, C = x.shape
    n = T - lens_x
    if spatial_size is None:
        a = b = int(math.sqrt(n))
    else:
        a, b = spatial_size
    if a * b != n:
        raise ValueError(f"spatial_size {a}x{b} does not match {n} spatial tokens")
    if a * b != _OUT_H * _OUT_W:
        # The module's final x.reshape(B, n, C) requires n == 16 * 10.
        raise ValueError("the module's final reshape requires a * b == 160")
    ll_shape = (_OUT_H, _OUT_W // 2, C // 2)
    if tuple(complex_weight.shape[:3]) != ll_shape:
        raise ValueError(
            f"Shape mismatch: weight {tuple(complex_weight.shape[:3])} != LL {ll_shape}")

    x = x.astype(jnp.float32)

    # dwt2 -> gate LL -> idwt2 (details untouched) + complex->float32 cast (keeps only
    # the real part) collapses to: o = y + blocksum_2x2(y) * (Re(w) - 1) / 4.
    w_gate = (complex_weight[..., 0].astype(jnp.float32) - 1.0) * 0.25    # (16, 5, C//2)
    w_dup = jnp.repeat(jnp.repeat(w_gate, 2, axis=1), 2, axis=2)          # (16, 10, C)
    w_dup = w_dup.reshape(_OUT_H * _OUT_W, C)

    if (a, b) == (_OUT_H, _OUT_W):
        r_mat = None          # resize to the same size is the identity -> skip entirely
    else:
        r_h = _bilinear_matrix(_OUT_H, a)                                  # (16, a)
        r_w = _bilinear_matrix(_OUT_W, b)                                  # (10, b)
        r_mat = jnp.einsum("pi,qj->pqij", r_h, r_w).reshape(_OUT_H * _OUT_W, a * b)

    return _spectral_gating_pallas(x, w_dup, r_mat, lens_x=lens_x)


if __name__ == "__main__":
    key = jax.random.PRNGKey(0)
    kx1, kx2, kw = jax.random.split(key, 3)

    C = 256
    lens_x = 8
    n = _OUT_H * _OUT_W                       # 160 spatial tokens
    h, w, dim = 16, 8, C // 2                 # weight (h, w//2+1, dim, 2) = (16, 5, 128, 2)
    complex_weight = 0.02 * jax.random.normal(kw, (h, w // 2 + 1, dim, 2), dtype=jnp.float32)

    def reference(xin, a, b):
        """Pure-JAX reference: gather-based bilinear resize, literal forward Haar dwt2
        over (W, C), gate LL with Re(weight), inverse Haar with untouched details."""
        Bq, Tq, Cq = xin.shape
        nq = Tq - lens_x
        z = xin[:, :lens_x, :]
        xs = xin[:, lens_x:, :].reshape(Bq, a, b, Cq).astype(jnp.float32)

        def coords(isz, osz):
            t = jnp.arange(osz, dtype=jnp.float32)
            s = jnp.maximum((t + 0.5) * (isz / osz) - 0.5, 0.0)
            lo = jnp.floor(s).astype(jnp.int32)
            hi = jnp.minimum(lo + 1, isz - 1)
            return lo, hi, s - lo.astype(jnp.float32)

        hlo, hhi, hf = coords(a, _OUT_H)
        wlo, whi, wf = coords(b, _OUT_W)
        xs = xs[:, hlo] * (1.0 - hf)[None, :, None, None] + xs[:, hhi] * hf[None, :, None, None]
        xs = (xs[:, :, wlo] * (1.0 - wf)[None, None, :, None]
              + xs[:, :, whi] * wf[None, None, :, None])                  # (B, 16, 10, C)

        e = xs.reshape(Bq, _OUT_H, _OUT_W // 2, 2, Cq // 2, 2)
        aa, ab_ = e[:, :, :, 0, :, 0], e[:, :, :, 0, :, 1]
        ba, bb = e[:, :, :, 1, :, 0], e[:, :, :, 1, :, 1]
        ll = (aa + ab_ + ba + bb) * 0.5
        lh = (aa - ab_ + ba - bb) * 0.5
        hl = (aa + ab_ - ba - bb) * 0.5
        hh = (aa - ab_ - ba + bb) * 0.5
        ll = ll * complex_weight[..., 0][None]
        ra = (ll + lh + hl + hh) * 0.5
        rb = (ll - lh + hl - hh) * 0.5
        rc = (ll + lh - hl - hh) * 0.5
        rd = (ll - lh - hl + hh) * 0.5
        rec = jnp.stack([jnp.stack([ra, rb], axis=-1),
                         jnp.stack([rc, rd], axis=-1)], axis=3)            # (B,16,5,2,C//2,2)
        return jnp.concatenate([z, rec.reshape(Bq, nq, Cq)], axis=1)

    # 1) Identity-resize path, (a, b) == (16, 10): resize skipped, fully fused kernel.
    x1 = jax.random.normal(kx1, (2, lens_x + n, C), dtype=jnp.float32)
    out1 = jax.block_until_ready(
        spectral_gating_network_forward(x1, lens_x, complex_weight, spatial_size=(16, 10)))
    assert out1.shape == x1.shape, (out1.shape, x1.shape)
    err1 = float(jnp.max(jnp.abs(out1 - reference(x1, 16, 10))))
    assert err1 < 1e-4, f"identity-resize path max abs err {err1}"

    # 2) Genuine resize path, (a, b) = (8, 20) -> (16, 10): resize fused into the kernel.
    x2 = jax.random.normal(kx2, (3, lens_x + n, C), dtype=jnp.float32)
    out2 = jax.block_until_ready(
        spectral_gating_network_forward(x2, lens_x, complex_weight, spatial_size=(8, 20)))
    assert out2.shape == x2.shape, (out2.shape, x2.shape)
    err2 = float(jnp.max(jnp.abs(out2 - reference(x2, 8, 20))))
    # Loose bound: the in-kernel f32 resize matmul may run as default-precision bf16
    # MXU passes; any structural/layout error would be O(1).
    assert err2 < 5e-2, f"fused-resize path max abs err {err2}"

    print("KERNEL_OK")
</pallas_src>

<mosaic_0001>
module attributes {stable_mosaic.version = 11 : i64} {
  func.func @_sgn_kernel(%arg0: i32, %arg1: memref<2x168x256xf32, #tpu.memory_space<vmem>>, %arg2: memref<160x256xf32, #tpu.memory_space<vmem>>, %arg3: memref<2x168x256xf32, #tpu.memory_space<vmem>>) attributes {dimension_semantics = [#tpu.dimension_semantics<parallel>], iteration_bounds = array<i64: 1>, scalar_prefetch = 0 : i64, scratch_operands = 0 : i64, tpu.core_type = #tpu.core_type<tc>, window_params = [{transform_indices = @transform_0, window_bounds = array<i64: 2, 168, 256>}, {pipeline_mode = #tpu.pipeline_mode<synchronous>, transform_indices = @transform_1, window_bounds = array<i64: 160, 256>}, {transform_indices = @transform_2, window_bounds = array<i64: 2, 168, 256>}]} {
    %c0 = arith.constant 0 : index
    %c0_0 = arith.constant 0 : index
    %0 = vector.load %arg2[%c0, %c0_0] : memref<160x256xf32, #tpu.memory_space<vmem>>, vector<160x256xf32>
    %1 = tpu.iota {dimensions = array<i32: 0>} : vector<160x256xi32>
    %2 = tpu.iota {dimensions = array<i32: 1>} : vector<160x256xi32>
    %c2_i32 = arith.constant 2 : i32
    %c0_i32 = arith.constant 0 : i32
    %3 = arith.cmpi eq, %c2_i32, %c0_i32 : i32
    %c1_i32 = arith.constant 1 : i32
    %4 = arith.select %3, %c1_i32, %c2_i32 : i32
    %5 = vector.broadcast %4 : i32 to vector<160x256xi32>
    %6 = arith.remsi %1, %5 : vector<160x256xi32>
    %c0_i32_1 = arith.constant 0 : i32
    %7 = vector.broadcast %c0_i32_1 : i32 to vector<160x256xi32>
    %8 = arith.cmpi ne, %6, %7 : vector<160x256xi32>
    %c0_i32_2 = arith.constant 0 : i32
    %9 = vector.broadcast %c0_i32_2 : i32 to vector<160x256xi32>
    %10 = arith.cmpi slt, %6, %9 : vector<160x256xi32>
    %c0_i32_3 = arith.constant 0 : i32
    %11 = arith.cmpi slt, %4, %c0_i32_3 : i32
    %12 = vector.broadcast %11 : i1 to vector<160x256xi1>
    %13 = vector.broadcast %12 : vector<160x256xi1> to vector<160x256xi1>
    %14 = arith.xori %10, %13 : vector<160x256xi1>
    %15 = arith.andi %14, %8 : vector<160x256xi1>
    %16 = vector.broadcast %4 : i32 to vector<160x256xi32>
    %17 = arith.addi %6, %16 : vector<160x256xi32>
    %18 = arith.select %15, %17, %6 : vector<160x256xi1>, vector<160x256xi32>
    %c0_i32_4 = arith.constant 0 : i32
    %19 = vector.broadcast %c0_i32_4 : i32 to vector<160x256xi32>
    %20 = arith.cmpi eq, %18, %19 : vector<160x256xi32>
    %c2_i32_5 = arith.constant 2 : i32
    %c0_i32_6 = arith.constant 0 : i32
    %21 = arith.cmpi eq, %c2_i32_5, %c0_i32_6 : i32
    %c1_i32_7 = arith.constant 1 : i32
    %22 = arith.select %21, %c1_i32_7, %c2_i32_5 : i32
    %23 = vector.broadcast %22 : i32 to vector<160x256xi32>
    %24 = arith.remsi %2, %23 : vector<160x256xi32>
    %c0_i32_8 = arith.constant 0 : i32
    %25 = vector.broadcast %c0_i32_8 : i32 to vector<160x256xi32>
    %26 = arith.cmpi ne, %24, %25 : vector<160x256xi32>
    %c0_i32_9 = arith.constant 0 : i32
    %27 = vector.broadcast %c0_i32_9 : i32 to vector<160x256xi32>
    %28 = arith.cmpi slt, %24, %27 : vector<160x256xi32>
    %c0_i32_10 = arith.constant 0 : i32
    %29 = arith.cmpi slt, %22, %c0_i32_10 : i32
    %30 = vector.broadcast %29 : i1 to vector<160x256xi1>
    %31 = vector.broadcast %30 : vector<160x256xi1> to vector<160x256xi1>
    %32 = arith.xori %28, %31 : vector<160x256xi1>
    %33 = arith.andi %32, %26 : vector<160x256xi1>
    %34 = vector.broadcast %22 : i32 to vector<160x256xi32>
    %35 = arith.addi %24, %34 : vector<160x256xi32>
    %36 = arith.select %33, %35, %24 : vector<160x256xi1>, vector<160x256xi32>
    %c0_i32_11 = arith.constant 0 : i32
    %37 = vector.broadcast %c0_i32_11 : i32 to vector<160x256xi32>
    %38 = arith.cmpi eq, %36, %37 : vector<160x256xi32>
    %c0_12 = arith.constant 0 : index
    %c0_13 = arith.constant 0 : index
    %c0_14 = arith.constant 0 : index
    %39 = vector.load %arg1[%c0_12, %c0_13, %c0_14] : memref<2x168x256xf32, #tpu.memory_space<vmem>>, vector<2x8x256xf32>
    %c0_15 = arith.constant 0 : index
    %c0_16 = arith.constant 0 : index
    %c0_17 = arith.constant 0 : index
    %40 = vector.load %arg3[%c0_15, %c0_16, %c0_17] : memref<2x168x256xf32, #tpu.memory_space<vmem>>, vector<2x8x256xf32>
    tpu.vector_store %arg3[%c0_15, %c0_16, %c0_17], %39 {strides = array<i32>} : memref<2x168x256xf32, #tpu.memory_space<vmem>>, vector<2x8x256xf32>,
    %c0_18 = arith.constant 0 : index
    %c8 = arith.constant 8 : index
    %c0_19 = arith.constant 0 : index
    %41 = vector.load %arg1[%c0_18, %c8, %c0_19] : memref<2x168x256xf32, #tpu.memory_space<vmem>>, vector<1x160x256xf32>
    %42 = vector.shape_cast %41 : vector<1x160x256xf32> to vector<160x256xf32>
    %c255_i32 = arith.constant 255 : i32
    %43 = tpu.dynamic_rotate %42 by %c255_i32 dim 1 : vector<160x256xf32>, i32 -> vector<160x256xf32>
    %c1_i32_20 = arith.constant 1 : i32
    %44 = tpu.dynamic_rotate %42 by %c1_i32_20 dim 1 : vector<160x256xf32>, i32 -> vector<160x256xf32>
    %45 = arith.select %38, %43, %44 : vector<160x256xi1>, vector<160x256xf32>
    %46 = arith.addf %42, %45 : vector<160x256xf32>
    %c159_i32 = arith.constant 159 : i32
    %47 = tpu.dynamic_rotate %46 by %c159_i32 dim 0 : vector<160x256xf32>, i32 -> vector<160x256xf32>
    %c1_i32_21 = arith.constant 1 : i32
    %48 = tpu.dynamic_rotate %46 by %c1_i32_21 dim 0 : vector<160x256xf32>, i32 -> vector<160x256xf32>
    %49 = arith.select %20, %47, %48 : vector<160x256xi1>, vector<160x256xf32>
    %50 = arith.addf %46, %49 : vector<160x256xf32>
    %51 = arith.mulf %0, %50 : vector<160x256xf32>
    %52 = arith.addf %42, %51 : vector<160x256xf32>
    %c0_22 = arith.constant 0 : index
    %c8_23 = arith.constant 8 : index
    %c0_24 = arith.constant 0 : index
    %53 = vector.load %arg3[%c0_22, %c8_23, %c0_24] : memref<2x168x256xf32, #tpu.memory_space<vmem>>, vector<1x160x256xf32>
    %54 = vector.shape_cast %53 : vector<1x160x256xf32> to vector<160x256xf32>
    %55 = vector.shape_cast %52 : vector<160x256xf32> to vector<1x160x256xf32>
    tpu.vector_store %arg3[%c0_22, %c8_23, %c0_24], %55 {strides = array<i32>} : memref<2x168x256xf32, #tpu.memory_space<vmem>>, vector<1x160x256xf32>,
    %c1 = arith.constant 1 : index
    %c8_25 = arith.constant 8 : index
    %c0_26 = arith.constant 0 : index
    %56 = vector.load %arg1[%c1, %c8_25, %c0_26] : memref<2x168x256xf32, #tpu.memory_space<vmem>>, vector<1x160x256xf32>
    %57 = vector.shape_cast %56 : vector<1x160x256xf32> to vector<160x256xf32>
    %c255_i32_27 = arith.constant 255 : i32
    %58 = tpu.dynamic_rotate %57 by %c255_i32_27 dim 1 : vector<160x256xf32>, i32 -> vector<160x256xf32>
    %c1_i32_28 = arith.constant 1 : i32
    %59 = tpu.dynamic_rotate %57 by %c1_i32_28 dim 1 : vector<160x256xf32>, i32 -> vector<160x256xf32>
    %60 = arith.select %38, %58, %59 : vector<160x256xi1>, vector<160x256xf32>
    %61 = arith.addf %57, %60 : vector<160x256xf32>
    %c159_i32_29 = arith.constant 159 : i32
    %62 = tpu.dynamic_rotate %61 by %c159_i32_29 dim 0 : vector<160x256xf32>, i32 -> vector<160x256xf32>
    %c1_i32_30 = arith.constant 1 : i32
    %63 = tpu.dynamic_rotate %61 by %c1_i32_30 dim 0 : vector<160x256xf32>, i32 -> vector<160x256xf32>
    %64 = arith.select %20, %62, %63 : vector<160x256xi1>, vector<160x256xf32>
    %65 = arith.addf %61, %64 : vector<160x256xf32>
    %66 = arith.mulf %0, %65 : vector<160x256xf32>
    %67 = arith.addf %57, %66 : vector<160x256xf32>
    %c1_31 = arith.constant 1 : index
    %c8_32 = arith.constant 8 : index
    %c0_33 = arith.constant 0 : index
    %68 = vector.load %arg3[%c1_31, %c8_32, %c0_33] : memref<2x168x256xf32, #tpu.memory_space<vmem>>, vector<1x160x256xf32>
    %69 = vector.shape_cast %68 : vector<1x160x256xf32> to vector<160x256xf32>
    %70 = vector.shape_cast %67 : vector<160x256xf32> to vector<1x160x256xf32>
    tpu.vector_store %arg3[%c1_31, %c8_32, %c0_33], %70 {strides = array<i32>} : memref<2x168x256xf32, #tpu.memory_space<vmem>>, vector<1x160x256xf32>,
    return
  }
  func.func @transform_0(%arg0: i32) -> (i32, i32, i32) {
    %c0_i32 = arith.constant 0 : i32
    %c0_i32_0 = arith.constant 0 : i32
    %c0_i32_1 = arith.constant 0 : i32
    return %arg0, %c0_i32, %c0_i32_0 : i32, i32, i32
  }
  func.func @transform_1(%arg0: i32) -> (i32, i32) {
    %c0_i32 = arith.constant 0 : i32
    %c0_i32_0 = arith.constant 0 : i32
    %c0_i32_1 = arith.constant 0 : i32
    return %c0_i32, %c0_i32_0 : i32, i32
  }
  func.func @transform_2(%arg0: i32) -> (i32, i32, i32) {
    %c0_i32 = arith.constant 0 : i32
    %c0_i32_0 = arith.constant 0 : i32
    %c0_i32_1 = arith.constant 0 : i32
    return %arg0, %c0_i32, %c0_i32_0 : i32, i32, i32
  }
}

</mosaic_0001>

<llo_original>
// kernel: tpu_custom_call.1
$region0: #{tpu_custom_call.1}
  #allocation0 [shape = 'u32[]', space=smem, size = 0x4, offset = 0x4, fixed_abs, tag = 'smem constant byte address 0x4 - core index']
  #allocation1 [shape = 'u32[144,128]{1,0:T(1,128)}', space=vmem, size = 0x12000, scoped, tag = 'internal scratch']
  %s0 = inlined_call_operand.hbm [shape: f32[2,168,256], index: 0, kind: input, shape index: {}]
  %s1 = inlined_call_operand.hbm [shape: f32[160,256], index: 1, kind: input, shape index: {}]
  %s2 = inlined_call_operand.hbm [shape: f32[2,168,256], index: 2, kind: output, shape index: {}]
  %s3 = sld [smem:[#allocation0]]
  $region26: #{tpu_custom_call.1} parent=0
    _
  %s5 = ssub.s32 1, %s3
  %s6 = scalar_select 0, %s5, %s3
  $region1: #{tpu_custom_call.1} parent=0
    #allocation2 [shape = 'u8[344064]{0}', space=vmem, size = 0x54000, scoped, tag = 'input window, operand 0, single buffered']
    #allocation3 [shape = 's32[1]{0}', space=sflag, size = 0x4, scoped, tag = 'scoped memory for tpu_custom_call.1']
    #allocation4 [shape = 's32[1]{0}', space=sflag, size = 0x4, scoped, tag = 'scoped memory for tpu_custom_call.1']
    #allocation5 [shape = 'u8[163840]{0}', space=vmem, size = 0x28000, scoped, tag = 'input window, operand 1, single buffered']
    #allocation6 [shape = 's32[1]{0}', space=sflag, size = 0x4, scoped, tag = 'scoped memory for tpu_custom_call.1']
    #allocation7 [shape = 'u8[344064]{0}', space=vmem, size = 0x54000, scoped, tag = 'output window, operand 0, single buffered']
    %7 = vsyncpa [#allocation3], 0
    %8 = vsyncpa [#allocation6], 0
    %9 = vsyncpa [#allocation4], 0
    // Predicated region
    $region2: #{tpu_custom_call.1} parent=1 // pred_check
      _
    $region3: #{tpu_custom_call.1} parent=1 // pred_check_branch
      %11 = sbr.rel (0) target = $region5
    $region4: #{tpu_custom_call.1} parent=1 // pred_region
      %s13 = ssub.s32 10752, 10752
      %14 = vsyncadd [#allocation3], %s13
      %s15 = sshll.u32 [#allocation2], 4
      %s16 = int_to_ptr.vmem [resolvable:$true] %s15
      %21 = dma.hbm_to_vmem [thread:$0]  %s0, 10752, %s16, [#allocation3], 256, 256, 16
    $region5: #{tpu_custom_call.1} parent=1 // pred_fallthru
      _
    // Predicated region
    $region6: #{tpu_custom_call.1} parent=1 // pred_check
      _
    $region7: #{tpu_custom_call.1} parent=1 // pred_check_branch
      %23 = sbr.rel (0) target = $region9
    $region8: #{tpu_custom_call.1} parent=1 // pred_region
      %s25 = ssub.s32 5120, 5120
      %26 = vsyncadd [#allocation6], %s25
      %s27 = sshll.u32 [#allocation5], 4
      %s28 = int_to_ptr.vmem [resolvable:$true] %s27
      %33 = dma.hbm_to_vmem [thread:$0]  %s1, 5120, %s28, [#allocation6], 256, 256, 16
    $region9: #{tpu_custom_call.1} parent=1 // pred_fallthru
      _
    // Predicated region
    $region10: #{tpu_custom_call.1} parent=1 // pred_check
      _
    $region11: #{tpu_custom_call.1} parent=1 // pred_check_branch
      %35 = sbr.rel (0) target = $region13
    $region12: #{tpu_custom_call.1} parent=1 // pred_region
      %36 = dma.done [#allocation3], 10752
    $region13: #{tpu_custom_call.1} parent=1 // pred_fallthru
      _
    // Predicated region
    $region14: #{tpu_custom_call.1} parent=1 // pred_check
      _
    $region15: #{tpu_custom_call.1} parent=1 // pred_check_branch
      %38 = sbr.rel (0) target = $region17
    $region16: #{tpu_custom_call.1} parent=1 // pred_region
      %39 = dma.done [#allocation6], 5120
    $region17: #{tpu_custom_call.1} parent=1 // pred_fallthru
      _
    %v40 = vld [vmem:[#allocation5] sm:$0xff]
    %v41 = vld [vmem:[#allocation5 + $0x8] sm:$0xff]
    %v42 = vld [vmem:[#allocation5 + $0x10] sm:$0xff]
    %v43 = vld [vmem:[#allocation5 + $0x18] sm:$0xff]
    %v44 = vld [vmem:[#allocation5 + $0x20] sm:$0xff]
    %v45 = vld [vmem:[#allocation5 + $0x28] sm:$0xff]
    %v46 = vld [vmem:[#allocation5 + $0x30] sm:$0xff]
    %v47 = vld [vmem:[#allocation5 + $0x38] sm:$0xff]
    %v48 = vld [vmem:[#allocation5 + $0x40] sm:$0xff]
    %v49 = vld [vmem:[#allocation5 + $0x48] sm:$0xff]
    %v50 = vld [vmem:[#allocation5 + $0x50] sm:$0xff]
    %v51 = vld [vmem:[#allocation5 + $0x58] sm:$0xff]
    %v52 = vld [vmem:[#allocation5 + $0x60] sm:$0xff]
    %v53 = vld [vmem:[#allocation5 + $0x68] sm:$0xff]
    %v54 = vld [vmem:[#allocation5 + $0x70] sm:$0xff]
    %v55 = vld [vmem:[#allocation5 + $0x78] sm:$0xff]
    %v56 = vld [vmem:[#allocation5 + $0x80] sm:$0xff]
    %v57 = vld [vmem:[#allocation5 + $0x88] sm:$0xff]
    %v58 = vld [vmem:[#allocation5 + $0x90] sm:$0xff]
    %v59 = vld [vmem:[#allocation5 + $0x98] sm:$0xff]
    %v60 = vld [vmem:[#allocation5 + $0xa0] sm:$0xff]
    %v61 = vld [vmem:[#allocation5 + $0xa8] sm:$0xff]
    %v62 = vld [vmem:[#allocation5 + $0xb0] sm:$0xff]
    %v63 = vld [vmem:[#allocation5 + $0xb8] sm:$0xff]
    %v64 = vld [vmem:[#allocation5 + $0xc0] sm:$0xff]
    %v65 = vld [vmem:[#allocation5 + $0xc8] sm:$0xff]
    %v66 = vld [vmem:[#allocation5 + $0xd0] sm:$0xff]
    %v67 = vld [vmem:[#allocation5 + $0xd8] sm:$0xff]
    %v68 = vld [vmem:[#allocation5 + $0xe0] sm:$0xff]
    %v69 = vld [vmem:[#allocation5 + $0xe8] sm:$0xff]
    %v70 = vld [vmem:[#allocation5 + $0xf0] sm:$0xff]
    %v71 = vld [vmem:[#allocation5 + $0xf8] sm:$0xff]
    %v72 = vld [vmem:[#allocation5 + $0x100] sm:$0xff]
    %v73 = vld [vmem:[#allocation5 + $0x108] sm:$0xff]
    %v74 = vld [vmem:[#allocation5 + $0x110] sm:$0xff]
    %v75 = vld [vmem:[#allocation5 + $0x118] sm:$0xff]
    %v76 = vld [vmem:[#allocation5 + $0x120] sm:$0xff]
    %v77 = vld [vmem:[#allocation5 + $0x128] sm:$0xff]
    %v78 = vld [vmem:[#allocation5 + $0x130] sm:$0xff]
    %v79 = vld [vmem:[#allocation5 + $0x138] sm:$0xff]
    %v80 = vlaneseq
    %v81 = vshrl.u32 %v80, 7
    %v82 = vadd.s32 %v81, 8
    %v83 = vadd.s32 %v81, 16
    %v84 = vadd.s32 %v81, 24
    %v85 = vadd.s32 %v81, 32
    %v86 = vadd.s32 %v81, 40
    %v87 = vadd.s32 %v81, 48
    %v88 = vadd.s32 %v81, 56
    %v89 = vadd.s32 %v81, 64
    %v90 = vadd.s32 %v81, 72
    %v91 = vadd.s32 %v81, 80
    %v92 = vadd.s32 %v81, 88
    %v93 = vadd.s32 %v81, 96
    %v94 = vadd.s32 %v81, 104
    %v95 = vadd.s32 %v81, 112
    %v96 = vadd.s32 %v81, 120
    %v97 = vadd.s32 %v81, 128
    %v98 = vadd.s32 %v81, 136
    %v99 = vadd.s32 %v81, 144
    %v100 = vadd.s32 %v81, 152
    %v101 = vlaneseq
    %v102 = vand.u32 %v101, 127
    %v103 = vadd.s32 %v102, 128
    %vm104 = vcmp.lt.s32.totalorder %v81, 0
    %v105 = vsub.s32 0, %v81
    %v106 = vsel %vm104, %v105, %v81
    %v107 = vshrl.u32 %v106, 1
    %v108 = vand.u32 %v106, 1
    %v109 = vsub.s32 0, %v108
    %v110 = vsel %vm104, %v109, %v108
    %vm111 = vcmp.lt.s32.totalorder %v82, 0
    %v112 = vsub.s32 0, %v82
    %v113 = vsel %vm111, %v112, %v82
    %v114 = vshrl.u32 %v113, 1
    %v115 = vand.u32 %v113, 1
    %v116 = vsub.s32 0, %v115
    %v117 = vsel %vm111, %v116, %v115
    %vm118 = vcmp.lt.s32.totalorder %v83, 0
    %v119 = vsub.s32 0, %v83
    %v120 = vsel %vm118, %v119, %v83
    %v121 = vshrl.u32 %v120, 1
    %v122 = vand.u32 %v120, 1
    %v123 = vsub.s32 0, %v122
    %v124 = vsel %vm118, %v123, %v122
    %vm125 = vcmp.lt.s32.totalorder %v84, 0
    %v126 = vsub.s32 0, %v84
    %v127 = vsel %vm125, %v126, %v84
    %v128 = vshrl.u32 %v127, 1
    %v129 = vand.u32 %v127, 1
    %v130 = vsub.s32 0, %v129
    %v131 = vsel %vm125, %v130, %v129
    %vm132 = vcmp.lt.s32.totalorder %v85, 0
    %v133 = vsub.s32 0, %v85
    %v134 = vsel %vm132, %v133, %v85
    %v135 = vshrl.u32 %v134, 1
    %v136 = vand.u32 %v134, 1
    %v137 = vsub.s32 0, %v136
    %v138 = vsel %vm132, %v137, %v136
    %vm139 = vcmp.lt.s32.totalorder %v86, 0
    %v140 = vsub.s32 0, %v86
    %v141 = vsel %vm139, %v140, %v86
    %v142 = vshrl.u32 %v141, 1
    %v143 = vand.u32 %v141, 1
    %v144 = vsub.s32 0, %v143
    %v145 = vsel %vm139, %v144, %v143
    %vm146 = vcmp.lt.s32.totalorder %v87, 0
    %v147 = vsub.s32 0, %v87
    %v148 = vsel %vm146, %v147, %v87
    %v149 = vshrl.u32 %v148, 1
    %v150 = vand.u32 %v148, 1
    %v151 = vsub.s32 0, %v150
    %v152 = vsel %vm146, %v151, %v150
    %vm153 = vcmp.lt.s32.totalorder %v88, 0
    %v154 = vsub.s32 0, %v88
    %v155 = vsel %vm153, %v154, %v88
    %v156 = vshrl.u32 %v155, 1
    %v157 = vand.u32 %v155, 1
    %v158 = vsub.s32 0, %v157
    %v159 = vsel %vm153, %v158, %v157
    %vm160 = vcmp.lt.s32.totalorder %v89, 0
    %v161 = vsub.s32 0, %v89
    %v162 = vsel %vm160, %v161, %v89
    %v163 = vshrl.u32 %v162, 1
    %v164 = vand.u32 %v162, 1
    %v165 = vsub.s32 0, %v164
    %v166 = vsel %vm160, %v165, %v164
    %vm167 = vcmp.lt.s32.totalorder %v90, 0
    %v168 = vsub.s32 0, %v90
    %v169 = vsel %vm167, %v168, %v90
    %v170 = vshrl.u32 %v169, 1
    %v171 = vand.u32 %v169, 1
    %v172 = vsub.s32 0, %v171
    %v173 = vsel %vm167, %v172, %v171
    %vm174 = vcmp.lt.s32.totalorder %v91, 0
    %v175 = vsub.s32 0, %v91
    %v176 = vsel %vm174, %v175, %v91
    %v177 = vshrl.u32 %v176, 1
    %v178 = vand.u32 %v176, 1
    %v179 = vsub.s32 0, %v178
    %v180 = vsel %vm174, %v179, %v178
    %vm181 = vcmp.lt.s32.totalorder %v92, 0
    %v182 = vsub.s32 0, %v92
    %v183 = vsel %vm181, %v182, %v92
    %v184 = vshrl.u32 %v183, 1
    %v185 = vand.u32 %v183, 1
    %v186 = vsub.s32 0, %v185
    %v187 = vsel %vm181, %v186, %v185
    %vm188 = vcmp.lt.s32.totalorder %v93, 0
    %v189 = vsub.s32 0, %v93
    %v190 = vsel %vm188, %v189, %v93
    %v191 = vshrl.u32 %v190, 1
    %v192 = vand.u32 %v190, 1
    %v193 = vsub.s32 0, %v192
    %v194 = vsel %vm188, %v193, %v192
    %vm195 = vcmp.lt.s32.totalorder %v94, 0
    %v196 = vsub.s32 0, %v94
    %v197 = vsel %vm195, %v196, %v94
    %v198 = vshrl.u32 %v197, 1
    %v199 = vand.u32 %v197, 1
    %v200 = vsub.s32 0, %v199
    %v201 = vsel %vm195, %v200, %v199
    %vm202 = vcmp.lt.s32.totalorder %v95, 0
    %v203 = vsub.s32 0, %v95
    %v204 = vsel %vm202, %v203, %v95
    %v205 = vshrl.u32 %v204, 1
    %v206 = vand.u32 %v204, 1
    %v207 = vsub.s32 0, %v206
    %v208 = vsel %vm202, %v207, %v206
    %vm209 = vcmp.lt.s32.totalorder %v96, 0
    %v210 = vsub.s32 0, %v96
    %v211 = vsel %vm209, %v210, %v96
    %v212 = vshrl.u32 %v211, 1
    %v213 = vand.u32 %v211, 1
    %v214 = vsub.s32 0, %v213
    %v215 = vsel %vm209, %v214, %v213
    %vm216 = vcmp.lt.s32.totalorder %v97, 0
    %v217 = vsub.s32 0, %v97
    %v218 = vsel %vm216, %v217, %v97
    %v219 = vshrl.u32 %v218, 1
    %v220 = vand.u32 %v218, 1
    %v221 = vsub.s32 0, %v220
    %v222 = vsel %vm216, %v221, %v220
    %vm223 = vcmp.lt.s32.totalorder %v98, 0
    %v224 = vsub.s32 0, %v98
    %v225 = vsel %vm223, %v224, %v98
    %v226 = vshrl.u32 %v225, 1
    %v227 = vand.u32 %v225, 1
    %v228 = vsub.s32 0, %v227
    %v229 = vsel %vm223, %v228, %v227
    %vm230 = vcmp.lt.s32.totalorder %v99, 0
    %v231 = vsub.s32 0, %v99
    %v232 = vsel %vm230, %v231, %v99
    %v233 = vshrl.u32 %v232, 1
    %v234 = vand.u32 %v232, 1
    %v235 = vsub.s32 0, %v234
    %v236 = vsel %vm230, %v235, %v234
    %vm237 = vcmp.lt.s32.totalorder %v100, 0
    %v238 = vsub.s32 0, %v100
    %v239 = vsel %vm237, %v238, %v100
    %v240 = vshrl.u32 %v239, 1
    %v241 = vand.u32 %v239, 1
    %v242 = vsub.s32 0, %v241
    %v243 = vsel %vm237, %v242, %v241
    %vm244 = vcmp.ne.s32.totalorder %v110, 0
    %vm245 = vcmp.ne.s32.totalorder %v117, 0
    %vm246 = vcmp.ne.s32.totalorder %v124, 0
    %vm247 = vcmp.ne.s32.totalorder %v131, 0
    %vm248 = vcmp.ne.s32.totalorder %v138, 0
    %vm249 = vcmp.ne.s32.totalorder %v145, 0
    %vm250 = vcmp.ne.s32.totalorder %v152, 0
    %vm251 = vcmp.ne.s32.totalorder %v159, 0
    %vm252 = vcmp.ne.s32.totalorder %v166, 0
    %vm253 = vcmp.ne.s32.totalorder %v173, 0
    %vm254 = vcmp.ne.s32.totalorder %v180, 0
    %vm255 = vcmp.ne.s32.totalorder %v187, 0
    %vm256 = vcmp.ne.s32.totalorder %v194, 0
    %vm257 = vcmp.ne.s32.totalorder %v201, 0
    %vm258 = vcmp.ne.s32.totalorder %v208, 0
    %vm259 = vcmp.ne.s32.totalorder %v215, 0
    %vm260 = vcmp.ne.s32.totalorder %v222, 0
    %vm261 = vcmp.ne.s32.totalorder %v229, 0
    %vm262 = vcmp.ne.s32.totalorder %v236, 0
    %vm263 = vcmp.ne.s32.totalorder %v243, 0
    %vm264 = vcmp.lt.s32.totalorder %v110, 0
    %vm265 = vcmp.lt.s32.totalorder %v117, 0
    %vm266 = vcmp.lt.s32.totalorder %v124, 0
    %vm267 = vcmp.lt.s32.totalorder %v131, 0
    %vm268 = vcmp.lt.s32.totalorder %v138, 0
    %vm269 = vcmp.lt.s32.totalorder %v145, 0
    %vm270 = vcmp.lt.s32.totalorder %v152, 0
    %vm271 = vcmp.lt.s32.totalorder %v159, 0
    %vm272 = vcmp.lt.s32.totalorder %v166, 0
    %vm273 = vcmp.lt.s32.totalorder %v173, 0
    %vm274 = vcmp.lt.s32.totalorder %v180, 0
    %vm275 = vcmp.lt.s32.totalorder %v187, 0
    %vm276 = vcmp.lt.s32.totalorder %v194, 0
    %vm277 = vcmp.lt.s32.totalorder %v201, 0
    %vm278 = vcmp.lt.s32.totalorder %v208, 0
    %vm279 = vcmp.lt.s32.totalorder %v215, 0
    %vm280 = vcmp.lt.s32.totalorder %v222, 0
    %vm281 = vcmp.lt.s32.totalorder %v229, 0
    %vm282 = vcmp.lt.s32.totalorder %v236, 0
    %vm283 = vcmp.lt.s32.totalorder %v243, 0
    %vm284 = vmand %vm264, %vm244
    %vm285 = vmand %vm265, %vm245
    %vm286 = vmand %vm266, %vm246
    %vm287 = vmand %vm267, %vm247
    %vm288 = vmand %vm268, %vm248
    %vm289 = vmand %vm269, %vm249
    %vm290 = vmand %vm270, %vm250
    %vm291 = vmand %vm271, %vm251
    %vm292 = vmand %vm272, %vm252
    %vm293 = vmand %vm273, %vm253
    %vm294 = vmand %vm274, %vm254
    %vm295 = vmand %vm275, %vm255
    %vm296 = vmand %vm276, %vm256
    %vm297 = vmand %vm277, %vm257
    %vm298 = vmand %vm278, %vm258
    %vm299 = vmand %vm279, %vm259
    %vm300 = vmand %vm280, %vm260
    %vm301 = vmand %vm281, %vm261
    %vm302 = vmand %vm282, %vm262
    %vm303 = vmand %vm283, %vm263
    %v304 = vadd.s32 %v110, 2
    %v305 = vadd.s32 %v117, 2
    %v306 = vadd.s32 %v124, 2
    %v307 = vadd.s32 %v131, 2
    %v308 = vadd.s32 %v138, 2
    %v309 = vadd.s32 %v145, 2
    %v310 = vadd.s32 %v152, 2
    %v311 = vadd.s32 %v159, 2
    %v312 = vadd.s32 %v166, 2
    %v313 = vadd.s32 %v173, 2
    %v314 = vadd.s32 %v180, 2
    %v315 = vadd.s32 %v187, 2
    %v316 = vadd.s32 %v194, 2
    %v317 = vadd.s32 %v201, 2
    %v318 = vadd.s32 %v208, 2
    %v319 = vadd.s32 %v215, 2
    %v320 = vadd.s32 %v222, 2
    %v321 = vadd.s32 %v229, 2
    %v322 = vadd.s32 %v236, 2
    %v323 = vadd.s32 %v243, 2
    %v324 = vsel %vm284, %v304, %v110
    %v325 = vsel %vm285, %v305, %v117
    %v326 = vsel %vm286, %v306, %v124
    %v327 = vsel %vm287, %v307, %v131
    %v328 = vsel %vm288, %v308, %v138
    %v329 = vsel %vm289, %v309, %v145
    %v330 = vsel %vm290, %v310, %v152
    %v331 = vsel %vm291, %v311, %v159
    %v332 = vsel %vm292, %v312, %v166
    %v333 = vsel %vm293, %v313, %v173
    %v334 = vsel %vm294, %v314, %v180
    %v335 = vsel %vm295, %v315, %v187
    %v336 = vsel %vm296, %v316, %v194
    %v337 = vsel %vm297, %v317, %v201
    %v338 = vsel %vm298, %v318, %v208
    %v339 = vsel %vm299, %v319, %v215
    %v340 = vsel %vm300, %v320, %v222
    %v341 = vsel %vm301, %v321, %v229
    %v342 = vsel %vm302, %v322, %v236
    %v343 = vsel %vm303, %v323, %v243
    %vm344 = vcmp.eq.s32.totalorder %v324, 0
    %vm345 = vcmp.eq.s32.totalorder %v325, 0
    %vm346 = vcmp.eq.s32.totalorder %v326, 0
    %vm347 = vcmp.eq.s32.totalorder %v327, 0
    %vm348 = vcmp.eq.s32.totalorder %v328, 0
    %vm349 = vcmp.eq.s32.totalorder %v329, 0
    %vm350 = vcmp.eq.s32.totalorder %v330, 0
    %vm351 = vcmp.eq.s32.totalorder %v331, 0
    %vm352 = vcmp.eq.s32.totalorder %v332, 0
    %vm353 = vcmp.eq.s32.totalorder %v333, 0
    %vm354 = vcmp.eq.s32.totalorder %v334, 0
    %vm355 = vcmp.eq.s32.totalorder %v335, 0
    %vm356 = vcmp.eq.s32.totalorder %v336, 0
    %vm357 = vcmp.eq.s32.totalorder %v337, 0
    %vm358 = vcmp.eq.s32.totalorder %v338, 0
    %vm359 = vcmp.eq.s32.totalorder %v339, 0
    %vm360 = vcmp.eq.s32.totalorder %v340, 0
    %vm361 = vcmp.eq.s32.totalorder %v341, 0
    %vm362 = vcmp.eq.s32.totalorder %v342, 0
    %vm363 = vcmp.eq.s32.totalorder %v343, 0
    %vm364 = vcmp.lt.s32.totalorder %v102, 0
    %v365 = vsub.s32 0, %v102
    %v366 = vsel %vm364, %v365, %v102
    %v367 = vshrl.u32 %v366, 1
    %v368 = vand.u32 %v366, 1
    %v369 = vsub.s32 0, %v368
    %v370 = vsel %vm364, %v369, %v368
    %vm371 = vcmp.lt.s32.totalorder %v103, 0
    %v372 = vsub.s32 0, %v103
    %v373 = vsel %vm371, %v372, %v103
    %v374 = vshrl.u32 %v373, 1
    %v375 = vand.u32 %v373, 1
    %v376 = vsub.s32 0, %v375
    %v377 = vsel %vm371, %v376, %v375
    %vm378 = vcmp.ne.s32.totalorder %v370, 0
    %vm379 = vcmp.ne.s32.totalorder %v377, 0
    %vm380 = vcmp.lt.s32.totalorder %v370, 0
    %vm381 = vcmp.lt.s32.totalorder %v377, 0
    %vm382 = vmand %vm380, %vm378
    %vm383 = vmand %vm381, %vm379
    %v384 = vadd.s32 %v370, 2
    %v385 = vadd.s32 %v377, 2
    %v386 = vsel %vm382, %v384, %v370
    %v387 = vsel %vm383, %v385, %v377
    %vm388 = vcmp.eq.s32.totalorder %v386, 0
    %vm389 = vcmp.eq.s32.totalorder %v387, 0
    %v390 = vld [vmem:[#allocation2] sm:$0xff]
    %v391 = vld [vmem:[#allocation2 + $0x8] sm:$0xff]
    %v392 = vld [vmem:[#allocation2 + $0x150] sm:$0xff]
    %v393 = vld [vmem:[#allocation2 + $0x158] sm:$0xff]
    %394 = vst [vmem:[#allocation7] sm:$0xff] %v390
    %395 = vst [vmem:[#allocation7 + $0x8] sm:$0xff] %v391
    %396 = vst [vmem:[#allocation7 + $0x150] sm:$0xff] %v392
    %397 = vst [vmem:[#allocation7 + $0x158] sm:$0xff] %v393
    %v398 = vld [vmem:[#allocation2 + $0x10] sm:$0xff]
    %v399 = vld [vmem:[#allocation2 + $0x18] sm:$0xff]
    %v400 = vld [vmem:[#allocation2 + $0x20] sm:$0xff]
    %v401 = vld [vmem:[#allocation2 + $0x28] sm:$0xff]
    %v402 = vld [vmem:[#allocation2 + $0x30] sm:$0xff]
    %v403 = vld [vmem:[#allocation2 + $0x38] sm:$0xff]
    %v404 = vld [vmem:[#allocation2 + $0x40] sm:$0xff]
    %v405 = vld [vmem:[#allocation2 + $0x48] sm:$0xff]
    %v406 = vld [vmem:[#allocation2 + $0x50] sm:$0xff]
    %v407 = vld [vmem:[#allocation2 + $0x58] sm:$0xff]
    %v408 = vld [vmem:[#allocation2 + $0x60] sm:$0xff]
    %v409 = vld [vmem:[#allocation2 + $0x68] sm:$0xff]
    %v410 = vld [vmem:[#allocation2 + $0x70] sm:$0xff]
    %v411 = vld [vmem:[#allocation2 + $0x78] sm:$0xff]
    %v412 = vld [vmem:[#allocation2 + $0x80] sm:$0xff]
    %v413 = vld [vmem:[#allocation2 + $0x88] sm:$0xff]
    %v414 = vld [vmem:[#allocation2 + $0x90] sm:$0xff]
    %v415 = vld [vmem:[#allocation2 + $0x98] sm:$0xff]
    %v416 = vld [vmem:[#allocation2 + $0xa0] sm:$0xff]
    %v417 = vld [vmem:[#allocation2 + $0xa8] sm:$0xff]
    %v418 = vld [vmem:[#allocation2 + $0xb0] sm:$0xff]
    %v419 = vld [vmem:[#allocation2 + $0xb8] sm:$0xff]
    %v420 = vld [vmem:[#allocation2 + $0xc0] sm:$0xff]
    %v421 = vld [vmem:[#allocation2 + $0xc8] sm:$0xff]
    %v422 = vld [vmem:[#allocation2 + $0xd0] sm:$0xff]
    %v423 = vld [vmem:[#allocation2 + $0xd8] sm:$0xff]
    %v424 = vld [vmem:[#allocation2 + $0xe0] sm:$0xff]
    %v425 = vld [vmem:[#allocation2 + $0xe8] sm:$0xff]
    %v426 = vld [vmem:[#allocation2 + $0xf0] sm:$0xff]
    %v427 = vld [vmem:[#allocation2 + $0xf8] sm:$0xff]
    %v428 = vld [vmem:[#allocation2 + $0x100] sm:$0xff]
    %v429 = vld [vmem:[#allocation2 + $0x108] sm:$0xff]
    %v430 = vld [vmem:[#allocation2 + $0x110] sm:$0xff]
    %v431 = vld [vmem:[#allocation2 + $0x118] sm:$0xff]
    %v432 = vld [vmem:[#allocation2 + $0x120] sm:$0xff]
    %v433 = vld [vmem:[#allocation2 + $0x128] sm:$0xff]
    %v434 = vld [vmem:[#allocation2 + $0x130] sm:$0xff]
    %v435 = vld [vmem:[#allocation2 + $0x138] sm:$0xff]
    %v436 = vld [vmem:[#allocation2 + $0x140] sm:$0xff]
    %v437 = vld [vmem:[#allocation2 + $0x148] sm:$0xff]
    %438 = vrot.lane.b32.xlu0 %v398, 127
    %v439 = vpop.permute.xlu0 %438
    %440 = vrot.lane.b32.xlu0 %v400, 127
    %v441 = vpop.permute.xlu0 %440
    %442 = vrot.lane.b32.xlu0 %v402, 127
    %v443 = vpop.permute.xlu0 %442
    %444 = vrot.lane.b32.xlu0 %v404, 127
    %v445 = vpop.permute.xlu0 %444
    %446 = vrot.lane.b32.xlu0 %v406, 127
    %v447 = vpop.permute.xlu0 %446
    %448 = vrot.lane.b32.xlu0 %v408, 127
    %v449 = vpop.permute.xlu0 %448
    %450 = vrot.lane.b32.xlu0 %v410, 127
    %v451 = vpop.permute.xlu0 %450
    %452 = vrot.lane.b32.xlu0 %v412, 127
    %v453 = vpop.permute.xlu0 %452
    %454 = vrot.lane.b32.xlu0 %v414, 127
    %v455 = vpop.permute.xlu0 %454
    %456 = vrot.lane.b32.xlu0 %v416, 127
    %v457 = vpop.permute.xlu0 %456
    %458 = vrot.lane.b32.xlu0 %v418, 127
    %v459 = vpop.permute.xlu0 %458
    %460 = vrot.lane.b32.xlu0 %v420, 127
    %v461 = vpop.permute.xlu0 %460
    %462 = vrot.lane.b32.xlu0 %v422, 127
    %v463 = vpop.permute.xlu0 %462
    %464 = vrot.lane.b32.xlu0 %v424, 127
    %v465 = vpop.permute.xlu0 %464
    %466 = vrot.lane.b32.xlu0 %v426, 127
    %v467 = vpop.permute.xlu0 %466
    %468 = vrot.lane.b32.xlu0 %v428, 127
    %v469 = vpop.permute.xlu0 %468
    %470 = vrot.lane.b32.xlu0 %v430, 127
    %v471 = vpop.permute.xlu0 %470
    %472 = vrot.lane.b32.xlu0 %v432, 127
    %v473 = vpop.permute.xlu0 %472
    %474 = vrot.lane.b32.xlu0 %v434, 127
    %v475 = vpop.permute.xlu0 %474
    %476 = vrot.lane.b32.xlu0 %v436, 127
    %v477 = vpop.permute.xlu0 %476
    %478 = vrot.lane.b32.xlu0 %v399, 127
    %v479 = vpop.permute.xlu0 %478
    %480 = vrot.lane.b32.xlu0 %v401, 127
    %v481 = vpop.permute.xlu0 %480
    %482 = vrot.lane.b32.xlu0 %v403, 127
    %v483 = vpop.permute.xlu0 %482
    %484 = vrot.lane.b32.xlu0 %v405, 127
    %v485 = vpop.permute.xlu0 %484
    %486 = vrot.lane.b32.xlu0 %v407, 127
    %v487 = vpop.permute.xlu0 %486
    %488 = vrot.lane.b32.xlu0 %v409, 127
    %v489 = vpop.permute.xlu0 %488
    %490 = vrot.lane.b32.xlu0 %v411, 127
    %v491 = vpop.permute.xlu0 %490
    %492 = vrot.lane.b32.xlu0 %v413, 127
    %v493 = vpop.permute.xlu0 %492
    %494 = vrot.lane.b32.xlu0 %v415, 127
    %v495 = vpop.permute.xlu0 %494
    %496 = vrot.lane.b32.xlu0 %v417, 127
    %v497 = vpop.permute.xlu0 %496
    %498 = vrot.lane.b32.xlu0 %v419, 127
    %v499 = vpop.permute.xlu0 %498
    %500 = vrot.lane.b32.xlu0 %v421, 127
    %v501 = vpop.permute.xlu0 %500
    %502 = vrot.lane.b32.xlu0 %v423, 127
    %v503 = vpop.permute.xlu0 %502
    %504 = vrot.lane.b32.xlu0 %v425, 127
    %v505 = vpop.permute.xlu0 %504
    %506 = vrot.lane.b32.xlu0 %v427, 127
    %v507 = vpop.permute.xlu0 %506
    %508 = vrot.lane.b32.xlu0 %v429, 127
    %v509 = vpop.permute.xlu0 %508
    %510 = vrot.lane.b32.xlu0 %v431, 127
    %v511 = vpop.permute.xlu0 %510
    %512 = vrot.lane.b32.xlu0 %v433, 127
    %v513 = vpop.permute.xlu0 %512
    %514 = vrot.lane.b32.xlu0 %v435, 127
    %v515 = vpop.permute.xlu0 %514
    %516 = vrot.lane.b32.xlu0 %v437, 127
    %v517 = vpop.permute.xlu0 %516
    %vm518 = vcmp.lt.s32.totalorder %v102, 127
    %v519 = vsel %vm518, %v439, %v479
    %v520 = vsel %vm518, %v441, %v481
    %v521 = vsel %vm518, %v443, %v483
    %v522 = vsel %vm518, %v445, %v485
    %v523 = vsel %vm518, %v447, %v487
    %v524 = vsel %vm518, %v449, %v489
    %v525 = vsel %vm518, %v451, %v491
    %v526 = vsel %vm518, %v453, %v493
    %v527 = vsel %vm518, %v455, %v495
    %v528 = vsel %vm518, %v457, %v497
    %v529 = vsel %vm518, %v459, %v499
    %v530 = vsel %vm518, %v461, %v501
    %v531 = vsel %vm518, %v463, %v503
    %v532 = vsel %vm518, %v465, %v505
    %v533 = vsel %vm518, %v467, %v507
    %v534 = vsel %vm518, %v469, %v509
    %v535 = vsel %vm518, %v471, %v511
    %v536 = vsel %vm518, %v473, %v513
    %v537 = vsel %vm518, %v475, %v515
    %v538 = vsel %vm518, %v477, %v517
    %v539 = vsel %vm518, %v479, %v439
    %v540 = vsel %vm518, %v481, %v441
    %v541 = vsel %vm518, %v483, %v443
    %v542 = vsel %vm518, %v485, %v445
    %v543 = vsel %vm518, %v487, %v447
    %v544 = vsel %vm518, %v489, %v449
    %v545 = vsel %vm518, %v491, %v451
    %v546 = vsel %vm518, %v493, %v453
    %v547 = vsel %vm518, %v495, %v455
    %v548 = vsel %vm518, %v497, %v457
    %v549 = vsel %vm518, %v499, %v459
    %v550 = vsel %vm518, %v501, %v461
    %v551 = vsel %vm518, %v503, %v463
    %v552 = vsel %vm518, %v505, %v465
    %v553 = vsel %vm518, %v507, %v467
    %v554 = vsel %vm518, %v509, %v469
    %v555 = vsel %vm518, %v511, %v471
    %v556 = vsel %vm518, %v513, %v473
    %v557 = vsel %vm518, %v515, %v475
    %v558 = vsel %vm518, %v517, %v477
    %559 = vrot.lane.b32.xlu0 %v398, 1
    %v560 = vpop.permute.xlu0 %559
    %561 = vrot.lane.b32.xlu0 %v400, 1
    %v562 = vpop.permute.xlu0 %561
    %563 = vrot.lane.b32.xlu0 %v402, 1
    %v564 = vpop.permute.xlu0 %563
    %565 = vrot.lane.b32.xlu0 %v404, 1
    %v566 = vpop.permute.xlu0 %565
    %567 = vrot.lane.b32.xlu0 %v406, 1
    %v568 = vpop.permute.xlu0 %567
    %569 = vrot.lane.b32.xlu0 %v408, 1
    %v570 = vpop.permute.xlu0 %569
    %571 = vrot.lane.b32.xlu0 %v410, 1
    %v572 = vpop.permute.xlu0 %571
    %573 = vrot.lane.b32.xlu0 %v412, 1
    %v574 = vpop.permute.xlu0 %573
    %575 = vrot.lane.b32.xlu0 %v414, 1
    %v576 = vpop.permute.xlu0 %575
    %577 = vrot.lane.b32.xlu0 %v416, 1
    %v578 = vpop.permute.xlu0 %577
    %579 = vrot.lane.b32.xlu0 %v418, 1
    %v580 = vpop.permute.xlu0 %579
    %581 = vrot.lane.b32.xlu0 %v420, 1
    %v582 = vpop.permute.xlu0 %581
    %583 = vrot.lane.b32.xlu0 %v422, 1
    %v584 = vpop.permute.xlu0 %583
    %585 = vrot.lane.b32.xlu0 %v424, 1
    %v586 = vpop.permute.xlu0 %585
    %587 = vrot.lane.b32.xlu0 %v426, 1
    %v588 = vpop.permute.xlu0 %587
    %589 = vrot.lane.b32.xlu0 %v428, 1
    %v590 = vpop.permute.xlu0 %589
    %591 = vrot.lane.b32.xlu0 %v430, 1
    %v592 = vpop.permute.xlu0 %591
    %593 = vrot.lane.b32.xlu0 %v432, 1
    %v594 = vpop.permute.xlu0 %593
    %595 = vrot.lane.b32.xlu0 %v434, 1
    %v596 = vpop.permute.xlu0 %595
    %597 = vrot.lane.b32.xlu0 %v436, 1
    %v598 = vpop.permute.xlu0 %597
    %599 = vrot.lane.b32.xlu0 %v399, 1
    %v600 = vpop.permute.xlu0 %599
    %601 = vrot.lane.b32.xlu0 %v401, 1
    %v602 = vpop.permute.xlu0 %601
    %603 = vrot.lane.b32.xlu0 %v403, 1
    %v604 = vpop.permute.xlu0 %603
    %605 = vrot.lane.b32.xlu0 %v405, 1
    %v606 = vpop.permute.xlu0 %605
    %607 = vrot.lane.b32.xlu0 %v407, 1
    %v608 = vpop.permute.xlu0 %607
    %609 = vrot.lane.b32.xlu0 %v409, 1
    %v610 = vpop.permute.xlu0 %609
    %611 = vrot.lane.b32.xlu0 %v411, 1
    %v612 = vpop.permute.xlu0 %611
    %613 = vrot.lane.b32.xlu0 %v413, 1
    %v614 = vpop.permute.xlu0 %613
    %615 = vrot.lane.b32.xlu0 %v415, 1
    %v616 = vpop.permute.xlu0 %615
    %617 = vrot.lane.b32.xlu0 %v417, 1
    %v618 = vpop.permute.xlu0 %617
    %619 = vrot.lane.b32.xlu0 %v419, 1
    %v620 = vpop.permute.xlu0 %619
    %621 = vrot.lane.b32.xlu0 %v421, 1
    %v622 = vpop.permute.xlu0 %621
    %623 = vrot.lane.b32.xlu0 %v423, 1
    %v624 = vpop.permute.xlu0 %623
    %625 = vrot.lane.b32.xlu0 %v425, 1
    %v626 = vpop.permute.xlu0 %625
    %627 = vrot.lane.b32.xlu0 %v427, 1
    %v628 = vpop.permute.xlu0 %627
    %629 = vrot.lane.b32.xlu0 %v429, 1
    %v630 = vpop.permute.xlu0 %629
    %631 = vrot.lane.b32.xlu0 %v431, 1
    %v632 = vpop.permute.xlu0 %631
    %633 = vrot.lane.b32.xlu0 %v433, 1
    %v634 = vpop.permute.xlu0 %633
    %635 = vrot.lane.b32.xlu0 %v435, 1
    %v636 = vpop.permute.xlu0 %635
    %637 = vrot.lane.b32.xlu0 %v437, 1
    %v638 = vpop.permute.xlu0 %637
    %vm639 = vcmp.lt.s32.totalorder %v102, 1
    %v640 = vsel %vm639, %v560, %v600
    %v641 = vsel %vm639, %v562, %v602
    %v642 = vsel %vm639, %v564, %v604
    %v643 = vsel %vm639, %v566, %v606
    %v644 = vsel %vm639, %v568, %v608
    %v645 = vsel %vm639, %v570, %v610
    %v646 = vsel %vm639, %v572, %v612
    %v647 = vsel %vm639, %v574, %v614
    %v648 = vsel %vm639, %v576, %v616
    %v649 = vsel %vm639, %v578, %v618
    %v650 = vsel %vm639, %v580, %v620
    %v651 = vsel %vm639, %v582, %v622
    %v652 = vsel %vm639, %v584, %v624
    %v653 = vsel %vm639, %v586, %v626
    %v654 = vsel %vm639, %v588, %v628
    %v655 = vsel %vm639, %v590, %v630
    %v656 = vsel %vm639, %v592, %v632
    %v657 = vsel %vm639, %v594, %v634
    %v658 = vsel %vm639, %v596, %v636
    %v659 = vsel %vm639, %v598, %v638
    %v660 = vsel %vm639, %v600, %v560
    %v661 = vsel %vm639, %v602, %v562
    %v662 = vsel %vm639, %v604, %v564
    %v663 = vsel %vm639, %v606, %v566
    %v664 = vsel %vm639, %v608, %v568
    %v665 = vsel %vm639, %v610, %v570
    %v666 = vsel %vm639, %v612, %v572
    %v667 = vsel %vm639, %v614, %v574
    %v668 = vsel %vm639, %v616, %v576
    %v669 = vsel %vm639, %v618, %v578
    %v670 = vsel %vm639, %v620, %v580
    %v671 = vsel %vm639, %v622, %v582
    %v672 = vsel %vm639, %v624, %v584
    %v673 = vsel %vm639, %v626, %v586
    %v674 = vsel %vm639, %v628, %v588
    %v675 = vsel %vm639, %v630, %v590
    %v676 = vsel %vm639, %v632, %v592
    %v677 = vsel %vm639, %v634, %v594
    %v678 = vsel %vm639, %v636, %v596
    %v679 = vsel %vm639, %v638, %v598
    %v680 = vsel %vm388, %v519, %v660
    %v681 = vsel %vm389, %v539, %v640
    %v682 = vsel %vm388, %v520, %v661
    %v683 = vsel %vm389, %v540, %v641
    %v684 = vsel %vm388, %v521, %v662
    %v685 = vsel %vm389, %v541, %v642
    %v686 = vsel %vm388, %v522, %v663
    %v687 = vsel %vm389, %v542, %v643
    %v688 = vsel %vm388, %v523, %v664
    %v689 = vsel %vm389, %v543, %v644
    %v690 = vsel %vm388, %v524, %v665
    %v691 = vsel %vm389, %v544, %v645
    %v692 = vsel %vm388, %v525, %v666
    %v693 = vsel %vm389, %v545, %v646
    %v694 = vsel %vm388, %v526, %v667
    %v695 = vsel %vm389, %v546, %v647
    %v696 = vsel %vm388, %v527, %v668
    %v697 = vsel %vm389, %v547, %v648
    %v698 = vsel %vm388, %v528, %v669
    %v699 = vsel %vm389, %v548, %v649
    %v700 = vsel %vm388, %v529, %v670
    %v701 = vsel %vm389, %v549, %v650
    %v702 = vsel %vm388, %v530, %v671
    %v703 = vsel %vm389, %v550, %v651
    %v704 = vsel %vm388, %v531, %v672
    %v705 = vsel %vm389, %v551, %v652
    %v706 = vsel %vm388, %v532, %v673
    %v707 = vsel %vm389, %v552, %v653
    %v708 = vsel %vm388, %v533, %v674
    %v709 = vsel %vm389, %v553, %v654
    %v710 = vsel %vm388, %v534, %v675
    %v711 = vsel %vm389, %v554, %v655
    %v712 = vsel %vm388, %v535, %v676
    %v713 = vsel %vm389, %v555, %v656
    %v714 = vsel %vm388, %v536, %v677
    %v715 = vsel %vm389, %v556, %v657
    %v716 = vsel %vm388, %v537, %v678
    %v717 = vsel %vm389, %v557, %v658
    %v718 = vsel %vm388, %v538, %v679
    %v719 = vsel %vm389, %v558, %v659
    %v720 = vadd.f32 %v398, %v680
    %v721 = vadd.f32 %v399, %v681
    %v722 = vadd.f32 %v400, %v682
    %v723 = vadd.f32 %v401, %v683
    %v724 = vadd.f32 %v402, %v684
    %v725 = vadd.f32 %v403, %v685
    %v726 = vadd.f32 %v404, %v686
    %v727 = vadd.f32 %v405, %v687
    %v728 = vadd.f32 %v406, %v688
    %v729 = vadd.f32 %v407, %v689
    %v730 = vadd.f32 %v408, %v690
    %v731 = vadd.f32 %v409, %v691
    %v732 = vadd.f32 %v410, %v692
    %v733 = vadd.f32 %v411, %v693
    %v734 = vadd.f32 %v412, %v694
    %v735 = vadd.f32 %v413, %v695
    %v736 = vadd.f32 %v414, %v696
    %v737 = vadd.f32 %v415, %v697
    %v738 = vadd.f32 %v416, %v698
    %v739 = vadd.f32 %v417, %v699
    %v740 = vadd.f32 %v418, %v700
    %v741 = vadd.f32 %v419, %v701
    %v742 = vadd.f32 %v420, %v702
    %v743 = vadd.f32 %v421, %v703
    %v744 = vadd.f32 %v422, %v704
    %v745 = vadd.f32 %v423, %v705
    %v746 = vadd.f32 %v424, %v706
    %v747 = vadd.f32 %v425, %v707
    %v748 = vadd.f32 %v426, %v708
    %v749 = vadd.f32 %v427, %v709
    %v750 = vadd.f32 %v428, %v710
    %v751 = vadd.f32 %v429, %v711
    %v752 = vadd.f32 %v430, %v712
    %v753 = vadd.f32 %v431, %v713
    %v754 = vadd.f32 %v432, %v714
    %v755 = vadd.f32 %v433, %v715
    %v756 = vadd.f32 %v434, %v716
    %v757 = vadd.f32 %v435, %v717
    %v758 = vadd.f32 %v436, %v718
    %v759 = vadd.f32 %v437, %v719
    %v760 = vrot.slane %v720, 1
    %v761 = vrot.slane %v721, 1
    %v762 = vrot.slane %v722, 1
    %v763 = vrot.slane %v723, 1
    %v764 = vrot.slane %v724, 1
    %v765 = vrot.slane %v725, 1
    %v766 = vrot.slane %v726, 1
    %v767 = vrot.slane %v727, 1
    %v768 = vrot.slane %v728, 1
    %v769 = vrot.slane %v729, 1
    %v770 = vrot.slane %v730, 1
    %v771 = vrot.slane %v731, 1
    %v772 = vrot.slane %v732, 1
    %v773 = vrot.slane %v733, 1
    %v774 = vrot.slane %v734, 1
    %v775 = vrot.slane %v735, 1
    %v776 = vrot.slane %v736, 1
    %v777 = vrot.slane %v737, 1
    %v778 = vrot.slane %v738, 1
    %v779 = vrot.slane %v739, 1
    %v780 = vrot.slane %v740, 1
    %v781 = vrot.slane %v741, 1
    %v782 = vrot.slane %v742, 1
    %v783 = vrot.slane %v743, 1
    %v784 = vrot.slane %v744, 1
    %v785 = vrot.slane %v745, 1
    %v786 = vrot.slane %v746, 1
    %v787 = vrot.slane %v747, 1
    %v788 = vrot.slane %v748, 1
    %v789 = vrot.slane %v749, 1
    %v790 = vrot.slane %v750, 1
    %v791 = vrot.slane %v751, 1
    %v792 = vrot.slane %v752, 1
    %v793 = vrot.slane %v753, 1
    %v794 = vrot.slane %v754, 1
    %v795 = vrot.slane %v755, 1
    %v796 = vrot.slane %v756, 1
    %v797 = vrot.slane %v757, 1
    %v798 = vrot.slane %v758, 1
    %v799 = vrot.slane %v759, 1
    %vm800 = vcmp.lt.s32.totalorder %v81, 7
    %v801 = vsel %vm800, %v796, %v798
    %v802 = vsel %vm800, %v797, %v799
    %v803 = vsel %vm800, %v794, %v796
    %v804 = vsel %vm800, %v795, %v797
    %v805 = vsel %vm800, %v792, %v794
    %v806 = vsel %vm800, %v793, %v795
    %v807 = vsel %vm800, %v790, %v792
    %v808 = vsel %vm800, %v791, %v793
    %v809 = vsel %vm800, %v788, %v790
    %v810 = vsel %vm800, %v789, %v791
    %v811 = vsel %vm800, %v786, %v788
    %v812 = vsel %vm800, %v787, %v789
    %v813 = vsel %vm800, %v784, %v786
    %v814 = vsel %vm800, %v785, %v787
    %v815 = vsel %vm800, %v782, %v784
    %v816 = vsel %vm800, %v783, %v785
    %v817 = vsel %vm800, %v780, %v782
    %v818 = vsel %vm800, %v781, %v783
    %v819 = vsel %vm800, %v778, %v780
    %v820 = vsel %vm800, %v779, %v781
    %v821 = vsel %vm800, %v776, %v778
    %v822 = vsel %vm800, %v777, %v779
    %v823 = vsel %vm800, %v774, %v776
    %v824 = vsel %vm800, %v775, %v777
    %v825 = vsel %vm800, %v772, %v774
    %v826 = vsel %vm800, %v773, %v775
    %v827 = vsel %vm800, %v770, %v772
    %v828 = vsel %vm800, %v771, %v773
    %v829 = vsel %vm800, %v768, %v770
    %v830 = vsel %vm800, %v769, %v771
    %v831 = vsel %vm800, %v766, %v768
    %v832 = vsel %vm800, %v767, %v769
    %v833 = vsel %vm800, %v764, %v766
    %v834 = vsel %vm800, %v765, %v767
    %v835 = vsel %vm800, %v762, %v764
    %v836 = vsel %vm800, %v763, %v765
    %v837 = vsel %vm800, %v760, %v762
    %v838 = vsel %vm800, %v761, %v763
    %v839 = vsel %vm800, %v798, %v760
    %v840 = vsel %vm800, %v799, %v761
    %v841 = vrot.slane %v720, 7
    %v842 = vrot.slane %v721, 7
    %v843 = vrot.slane %v722, 7
    %v844 = vrot.slane %v723, 7
    %v845 = vrot.slane %v724, 7
    %v846 = vrot.slane %v725, 7
    %v847 = vrot.slane %v726, 7
    %v848 = vrot.slane %v727, 7
    %v849 = vrot.slane %v728, 7
    %v850 = vrot.slane %v729, 7
    %v851 = vrot.slane %v730, 7
    %v852 = vrot.slane %v731, 7
    %v853 = vrot.slane %v732, 7
    %v854 = vrot.slane %v733, 7
    %v855 = vrot.slane %v734, 7
    %v856 = vrot.slane %v735, 7
    %v857 = vrot.slane %v736, 7
    %v858 = vrot.slane %v737, 7
    %v859 = vrot.slane %v738, 7
    %v860 = vrot.slane %v739, 7
    %v861 = vrot.slane %v740, 7
    %v862 = vrot.slane %v741, 7
    %v863 = vrot.slane %v742, 7
    %v864 = vrot.slane %v743, 7
    %v865 = vrot.slane %v744, 7
    %v866 = vrot.slane %v745, 7
    %v867 = vrot.slane %v746, 7
    %v868 = vrot.slane %v747, 7
    %v869 = vrot.slane %v748, 7
    %v870 = vrot.slane %v749, 7
    %v871 = vrot.slane %v750, 7
    %v872 = vrot.slane %v751, 7
    %v873 = vrot.slane %v752, 7
    %v874 = vrot.slane %v753, 7
    %v875 = vrot.slane %v754, 7
    %v876 = vrot.slane %v755, 7
    %v877 = vrot.slane %v756, 7
    %v878 = vrot.slane %v757, 7
    %v879 = vrot.slane %v758, 7
    %v880 = vrot.slane %v759, 7
    %vm881 = vcmp.lt.s32.totalorder %v81, 1
    %v882 = vsel %vm881, %v877, %v879
    %v883 = vsel %vm881, %v878, %v880
    %v884 = vsel %vm881, %v875, %v877
    %v885 = vsel %vm881, %v876, %v878
    %v886 = vsel %vm881, %v873, %v875
    %v887 = vsel %vm881, %v874, %v876
    %v888 = vsel %vm881, %v871, %v873
    %v889 = vsel %vm881, %v872, %v874
    %v890 = vsel %vm881, %v869, %v871
    %v891 = vsel %vm881, %v870, %v872
    %v892 = vsel %vm881, %v867, %v869
    %v893 = vsel %vm881, %v868, %v870
    %v894 = vsel %vm881, %v865, %v867
    %v895 = vsel %vm881, %v866, %v868
    %v896 = vsel %vm881, %v863, %v865
    %v897 = vsel %vm881, %v864, %v866
    %v898 = vsel %vm881, %v861, %v863
    %v899 = vsel %vm881, %v862, %v864
    %v900 = vsel %vm881, %v859, %v861
    %v901 = vsel %vm881, %v860, %v862
    %v902 = vsel %vm881, %v857, %v859
    %v903 = vsel %vm881, %v858, %v860
    %v904 = vsel %vm881, %v855, %v857
    %v905 = vsel %vm881, %v856, %v858
    %v906 = vsel %vm881, %v853, %v855
    %v907 = vsel %vm881, %v854, %v856
    %v908 = vsel %vm881, %v851, %v853
    %v909 = vsel %vm881, %v852, %v854
    %v910 = vsel %vm881, %v849, %v851
    %v911 = vsel %vm881, %v850, %v852
    %v912 = vsel %vm881, %v847, %v849
    %v913 = vsel %vm881, %v848, %v850
    %v914 = vsel %vm881, %v845, %v847
    %v915 = vsel %vm881, %v846, %v848
    %v916 = vsel %vm881, %v843, %v845
    %v917 = vsel %vm881, %v844, %v846
    %v918 = vsel %vm881, %v841, %v843
    %v919 = vsel %vm881, %v842, %v844
    %v920 = vsel %vm881, %v879, %v841
    %v921 = vsel %vm881, %v880, %v842
    %v922 = vsel %vm344, %v837, %v920
    %v923 = vsel %vm344, %v838, %v921
    %v924 = vsel %vm345, %v835, %v918
    %v925 = vsel %vm345, %v836, %v919
    %v926 = vsel %vm346, %v833, %v916
    %v927 = vsel %vm346, %v834, %v917
    %v928 = vsel %vm347, %v831, %v914
    %v929 = vsel %vm347, %v832, %v915
    %v930 = vsel %vm348, %v829, %v912
    %v931 = vsel %vm348, %v830, %v913
    %v932 = vsel %vm349, %v827, %v910
    %v933 = vsel %vm349, %v828, %v911
    %v934 = vsel %vm350, %v825, %v908
    %v935 = vsel %vm350, %v826, %v909
    %v936 = vsel %vm351, %v823, %v906
    %v937 = vsel %vm351, %v824, %v907
    %v938 = vsel %vm352, %v821, %v904
    %v939 = vsel %vm352, %v822, %v905
    %v940 = vsel %vm353, %v819, %v902
    %v941 = vsel %vm353, %v820, %v903
    %v942 = vsel %vm354, %v817, %v900
    %v943 = vsel %vm354, %v818, %v901
    %v944 = vsel %vm355, %v815, %v898
    %v945 = vsel %vm355, %v816, %v899
    %v946 = vsel %vm356, %v813, %v896
    %v947 = vsel %vm356, %v814, %v897
    %v948 = vsel %vm357, %v811, %v894
    %v949 = vsel %vm357, %v812, %v895
    %v950 = vsel %vm358, %v809, %v892
    %v951 = vsel %vm358, %v810, %v893
    %v952 = vsel %vm359, %v807, %v890
    %v953 = vsel %vm359, %v808, %v891
    %v954 = vsel %vm360, %v805, %v888
    %v955 = vsel %vm360, %v806, %v889
    %v956 = vsel %vm361, %v803, %v886
    %v957 = vsel %vm361, %v804, %v887
    %v958 = vsel %vm362, %v801, %v884
    %v959 = vsel %vm362, %v802, %v885
    %v960 = vsel %vm363, %v839, %v882
    %v961 = vsel %vm363, %v840, %v883
    %v962 = vadd.f32 %v720, %v922
    %v963 = vadd.f32 %v721, %v923
    %v964 = vadd.f32 %v722, %v924
    %v965 = vadd.f32 %v723, %v925
    %v966 = vadd.f32 %v724, %v926
    %v967 = vadd.f32 %v725, %v927
    %v968 = vadd.f32 %v726, %v928
    %v969 = vadd.f32 %v727, %v929
    %v970 = vadd.f32 %v728, %v930
    %v971 = vadd.f32 %v729, %v931
    %v972 = vadd.f32 %v730, %v932
    %v973 = vadd.f32 %v731, %v933
    %v974 = vadd.f32 %v732, %v934
    %v975 = vadd.f32 %v733, %v935
    %v976 = vadd.f32 %v734, %v936
    %v977 = vadd.f32 %v735, %v937
    %v978 = vadd.f32 %v736, %v938
    %v979 = vadd.f32 %v737, %v939
    %v980 = vadd.f32 %v738, %v940
    %v981 = vadd.f32 %v739, %v941
    %v982 = vadd.f32 %v740, %v942
    %v983 = vadd.f32 %v741, %v943
    %v984 = vadd.f32 %v742, %v944
    %v985 = vadd.f32 %v743, %v945
    %v986 = vadd.f32 %v744, %v946
    %v987 = vadd.f32 %v745, %v947
    %v988 = vadd.f32 %v746, %v948
    %v989 = vadd.f32 %v747, %v949
    %v990 = vadd.f32 %v748, %v950
    %v991 = vadd.f32 %v749, %v951
    %v992 = vadd.f32 %v750, %v952
    %v993 = vadd.f32 %v751, %v953
    %v994 = vadd.f32 %v752, %v954
    %v995 = vadd.f32 %v753, %v955
    %v996 = vadd.f32 %v754, %v956
    %v997 = vadd.f32 %v755, %v957
    %v998 = vadd.f32 %v756, %v958
    %v999 = vadd.f32 %v757, %v959
    %v1000 = vadd.f32 %v758, %v960
    %v1001 = vadd.f32 %v759, %v961
    %v1002 = vmul.f32 %v40, %v962
    %v1003 = vmul.f32 %v41, %v963
    %v1004 = vmul.f32 %v42, %v964
    %v1005 = vmul.f32 %v43, %v965
    %v1006 = vmul.f32 %v44, %v966
    %v1007 = vmul.f32 %v45, %v967
    %v1008 = vmul.f32 %v46, %v968
    %v1009 = vmul.f32 %v47, %v969
    %v1010 = vmul.f32 %v48, %v970
    %v1011 = vmul.f32 %v49, %v971
    %v1012 = vmul.f32 %v50, %v972
    %v1013 = vmul.f32 %v51, %v973
    %v1014 = vmul.f32 %v52, %v974
    %v1015 = vmul.f32 %v53, %v975
    %v1016 = vmul.f32 %v54, %v976
    %v1017 = vmul.f32 %v55, %v977
    %v1018 = vmul.f32 %v56, %v978
    %v1019 = vmul.f32 %v57, %v979
    %v1020 = vmul.f32 %v58, %v980
    %v1021 = vmul.f32 %v59, %v981
    %v1022 = vmul.f32 %v60, %v982
    %v1023 = vmul.f32 %v61, %v983
    %v1024 = vmul.f32 %v62, %v984
    %v1025 = vmul.f32 %v63, %v985
    %v1026 = vmul.f32 %v64, %v986
    %v1027 = vmul.f32 %v65, %v987
    %v1028 = vmul.f32 %v66, %v988
    %v1029 = vmul.f32 %v67, %v989
    %v1030 = vmul.f32 %v68, %v990
    %v1031 = vmul.f32 %v69, %v991
    %v1032 = vmul.f32 %v70, %v992
    %v1033 = vmul.f32 %v71, %v993
    %v1034 = vmul.f32 %v72, %v994
    %v1035 = vmul.f32 %v73, %v995
    %v1036 = vmul.f32 %v74, %v996
    %v1037 = vmul.f32 %v75, %v997
    %v1038 = vmul.f32 %v76, %v998
    %v1039 = vmul.f32 %v77, %v999
    %v1040 = vmul.f32 %v78, %v1000
    %v1041 = vmul.f32 %v79, %v1001
    %v1042 = vadd.f32 %v398, %v1002
    %v1043 = vadd.f32 %v399, %v1003
    %v1044 = vadd.f32 %v400, %v1004
    %v1045 = vadd.f32 %v401, %v1005
    %v1046 = vadd.f32 %v402, %v1006
    %v1047 = vadd.f32 %v403, %v1007
    %v1048 = vadd.f32 %v404, %v1008
    %v1049 = vadd.f32 %v405, %v1009
    %v1050 = vadd.f32 %v406, %v1010
    %v1051 = vadd.f32 %v407, %v1011
    %v1052 = vadd.f32 %v408, %v1012
    %v1053 = vadd.f32 %v409, %v1013
    %v1054 = vadd.f32 %v410, %v1014
    %v1055 = vadd.f32 %v411, %v1015
    %v1056 = vadd.f32 %v412, %v1016
    %v1057 = vadd.f32 %v413, %v1017
    %v1058 = vadd.f32 %v414, %v1018
    %v1059 = vadd.f32 %v415, %v1019
    %v1060 = vadd.f32 %v416, %v1020
    %v1061 = vadd.f32 %v417, %v1021
    %v1062 = vadd.f32 %v418, %v1022
    %v1063 = vadd.f32 %v419, %v1023
    %v1064 = vadd.f32 %v420, %v1024
    %v1065 = vadd.f32 %v421, %v1025
    %v1066 = vadd.f32 %v422, %v1026
    %v1067 = vadd.f32 %v423, %v1027
    %v1068 = vadd.f32 %v424, %v1028
    %v1069 = vadd.f32 %v425, %v1029
    %v1070 = vadd.f32 %v426, %v1030
    %v1071 = vadd.f32 %v427, %v1031
    %v1072 = vadd.f32 %v428, %v1032
    %v1073 = vadd.f32 %v429, %v1033
    %v1074 = vadd.f32 %v430, %v1034
    %v1075 = vadd.f32 %v431, %v1035
    %v1076 = vadd.f32 %v432, %v1036
    %v1077 = vadd.f32 %v433, %v1037
    %v1078 = vadd.f32 %v434, %v1038
    %v1079 = vadd.f32 %v435, %v1039
    %v1080 = vadd.f32 %v436, %v1040
    %v1081 = vadd.f32 %v437, %v1041
    %1082 = vst [vmem:[#allocation7 + $0x10] sm:$0xff] %v1042
    %1083 = vst [vmem:[#allocation7 + $0x18] sm:$0xff] %v1043
    %1084 = vst [vmem:[#allocation7 + $0x20] sm:$0xff] %v1044
    %1085 = vst [vmem:[#allocation7 + $0x28] sm:$0xff] %v1045
    %1086 = vst [vmem:[#allocation7 + $0x30] sm:$0xff] %v1046
    %1087 = vst [vmem:[#allocation7 + $0x38] sm:$0xff] %v1047
    %1088 = vst [vmem:[#allocation7 + $0x40] sm:$0xff] %v1048
    %1089 = vst [vmem:[#allocation7 + $0x48] sm:$0xff] %v1049
    %1090 = vst [vmem:[#allocation7 + $0x50] sm:$0xff] %v1050
    %1091 = vst [vmem:[#allocation7 + $0x58] sm:$0xff] %v1051
    %1092 = vst [vmem:[#allocation7 + $0x60] sm:$0xff] %v1052
    %1093 = vst [vmem:[#allocation7 + $0x68] sm:$0xff] %v1053
    %1094 = vst [vmem:[#allocation7 + $0x70] sm:$0xff] %v1054
    %1095 = vst [vmem:[#allocation7 + $0x78] sm:$0xff] %v1055
    %1096 = vst [vmem:[#allocation7 + $0x80] sm:$0xff] %v1056
    %1097 = vst [vmem:[#allocation7 + $0x88] sm:$0xff] %v1057
    %1098 = vst [vmem:[#allocation7 + $0x90] sm:$0xff] %v1058
    %1099 = vst [vmem:[#allocation7 + $0x98] sm:$0xff] %v1059
    %1100 = vst [vmem:[#allocation7 + $0xa0] sm:$0xff] %v1060
    %1101 = vst [vmem:[#allocation7 + $0xa8] sm:$0xff] %v1061
    %1102 = vst [vmem:[#allocation7 + $0xb0] sm:$0xff] %v1062
    %1103 = vst [vmem:[#allocation7 + $0xb8] sm:$0xff] %v1063
    %1104 = vst [vmem:[#allocation7 + $0xc0] sm:$0xff] %v1064
    %1105 = vst [vmem:[#allocation7 + $0xc8] sm:$0xff] %v1065
    %1106 = vst [vmem:[#allocation7 + $0xd0] sm:$0xff] %v1066
    %1107 = vst [vmem:[#allocation7 + $0xd8] sm:$0xff] %v1067
    %1108 = vst [vmem:[#allocation7 + $0xe0] sm:$0xff] %v1068
    %1109 = vst [vmem:[#allocation7 + $0xe8] sm:$0xff] %v1069
    %1110 = vst [vmem:[#allocation7 + $0xf0] sm:$0xff] %v1070
    %1111 = vst [vmem:[#allocation7 + $0xf8] sm:$0xff] %v1071
    %1112 = vst [vmem:[#allocation7 + $0x100] sm:$0xff] %v1072
    %1113 = vst [vmem:[#allocation7 + $0x108] sm:$0xff] %v1073
    %1114 = vst [vmem:[#allocation7 + $0x110] sm:$0xff] %v1074
    %1115 = vst [vmem:[#allocation7 + $0x118] sm:$0xff] %v1075
    %1116 = vst [vmem:[#allocation7 + $0x120] sm:$0xff] %v1076
    %1117 = vst [vmem:[#allocation7 + $0x128] sm:$0xff] %v1077
    %1118 = vst [vmem:[#allocation7 + $0x130] sm:$0xff] %v1078
    %1119 = vst [vmem:[#allocation7 + $0x138] sm:$0xff] %v1079
    %1120 = vst [vmem:[#allocation7 + $0x140] sm:$0xff] %v1080
    %1121 = vst [vmem:[#allocation7 + $0x148] sm:$0xff] %v1081
    %s1122 = scalar_lea.vmem [#allocation2], 336
    %v1123 = vld [vmem:[%s1122 + $0x10] sm:$0xff]
    %v1124 = vld [vmem:[%s1122 + $0x18] sm:$0xff]
    %v1125 = vld [vmem:[%s1122 + $0x20] sm:$0xff]
    %v1126 = vld [vmem:[%s1122 + $0x28] sm:$0xff]
    %v1127 = vld [vmem:[%s1122 + $0x30] sm:$0xff]
    %v1128 = vld [vmem:[%s1122 + $0x38] sm:$0xff]
    %v1129 = vld [vmem:[%s1122 + $0x40] sm:$0xff]
    %v1130 = vld [vmem:[%s1122 + $0x48] sm:$0xff]
    %v1131 = vld [vmem:[%s1122 + $0x50] sm:$0xff]
    %v1132 = vld [vmem:[%s1122 + $0x58] sm:$0xff]
    %v1133 = vld [vmem:[%s1122 + $0x60] sm:$0xff]
    %v1134 = vld [vmem:[%s1122 + $0x68] sm:$0xff]
    %v1135 = vld [vmem:[%s1122 + $0x70] sm:$0xff]
    %v1136 = vld [vmem:[%s1122 + $0x78] sm:$0xff]
    %v1137 = vld [vmem:[%s1122 + $0x80] sm:$0xff]
    %v1138 = vld [vmem:[%s1122 + $0x88] sm:$0xff]
    %v1139 = vld [vmem:[%s1122 + $0x90] sm:$0xff]
    %v1140 = vld [vmem:[%s1122 + $0x98] sm:$0xff]
    %v1141 = vld [vmem:[%s1122 + $0xa0] sm:$0xff]
    %v1142 = vld [vmem:[%s1122 + $0xa8] sm:$0xff]
    %v1143 = vld [vmem:[%s1122 + $0xb0] sm:$0xff]
    %v1144 = vld [vmem:[%s1122 + $0xb8] sm:$0xff]
    %v1145 = vld [vmem:[%s1122 + $0xc0] sm:$0xff]
    %v1146 = vld [vmem:[%s1122 + $0xc8] sm:$0xff]
    %v1147 = vld [vmem:[%s1122 + $0xd0] sm:$0xff]
    %v1148 = vld [vmem:[%s1122 + $0xd8] sm:$0xff]
    %v1149 = vld [vmem:[%s1122 + $0xe0] sm:$0xff]
    %v1150 = vld [vmem:[%s1122 + $0xe8] sm:$0xff]
    %v1151 = vld [vmem:[%s1122 + $0xf0] sm:$0xff]
    %v1152 = vld [vmem:[%s1122 + $0xf8] sm:$0xff]
    %v1153 = vld [vmem:[%s1122 + $0x100] sm:$0xff]
    %v1154 = vld [vmem:[%s1122 + $0x108] sm:$0xff]
    %v1155 = vld [vmem:[%s1122 + $0x110] sm:$0xff]
    %v1156 = vld [vmem:[%s1122 + $0x118] sm:$0xff]
    %v1157 = vld [vmem:[%s1122 + $0x120] sm:$0xff]
    %v1158 = vld [vmem:[%s1122 + $0x128] sm:$0xff]
    %v1159 = vld [vmem:[%s1122 + $0x130] sm:$0xff]
    %v1160 = vld [vmem:[%s1122 + $0x138] sm:$0xff]
    %v1161 = vld [vmem:[%s1122 + $0x140] sm:$0xff]
    %v1162 = vld [vmem:[%s1122 + $0x148] sm:$0xff]
    %1163 = vrot.lane.b32.xlu0 %v1123, 127
    %v1164 = vpop.permute.xlu0 %1163
    %1165 = vrot.lane.b32.xlu0 %v1125, 127
    %v1166 = vpop.permute.xlu0 %1165
    %1167 = vrot.lane.b32.xlu0 %v1127, 127
    %v1168 = vpop.permute.xlu0 %1167
    %1169 = vrot.lane.b32.xlu0 %v1129, 127
    %v1170 = vpop.permute.xlu0 %1169
    %1171 = vrot.lane.b32.xlu0 %v1131, 127
    %v1172 = vpop.permute.xlu0 %1171
    %1173 = vrot.lane.b32.xlu0 %v1133, 127
    %v1174 = vpop.permute.xlu0 %1173
    %1175 = vrot.lane.b32.xlu0 %v1135, 127
    %v1176 = vpop.permute.xlu0 %1175
    %1177 = vrot.lane.b32.xlu0 %v1137, 127
    %v1178 = vpop.permute.xlu0 %1177
    %1179 = vrot.lane.b32.xlu0 %v1139, 127
    %v1180 = vpop.permute.xlu0 %1179
    %1181 = vrot.lane.b32.xlu0 %v1141, 127
    %v1182 = vpop.permute.xlu0 %1181
    %1183 = vrot.lane.b32.xlu0 %v1143, 127
    %v1184 = vpop.permute.xlu0 %1183
    %1185 = vrot.lane.b32.xlu0 %v1145, 127
    %v1186 = vpop.permute.xlu0 %1185
    %1187 = vrot.lane.b32.xlu0 %v1147, 127
    %v1188 = vpop.permute.xlu0 %1187
    %1189 = vrot.lane.b32.xlu0 %v1149, 127
    %v1190 = vpop.permute.xlu0 %1189
    %1191 = vrot.lane.b32.xlu0 %v1151, 127
    %v1192 = vpop.permute.xlu0 %1191
    %1193 = vrot.lane.b32.xlu0 %v1153, 127
    %v1194 = vpop.permute.xlu0 %1193
    %1195 = vrot.lane.b32.xlu0 %v1155, 127
    %v1196 = vpop.permute.xlu0 %1195
    %1197 = vrot.lane.b32.xlu0 %v1157, 127
    %v1198 = vpop.permute.xlu0 %1197
    %1199 = vrot.lane.b32.xlu0 %v1159, 127
    %v1200 = vpop.permute.xlu0 %1199
    %1201 = vrot.lane.b32.xlu0 %v1161, 127
    %v1202 = vpop.permute.xlu0 %1201
    %1203 = vrot.lane.b32.xlu0 %v1124, 127
    %v1204 = vpop.permute.xlu0 %1203
    %1205 = vrot.lane.b32.xlu0 %v1126, 127
    %v1206 = vpop.permute.xlu0 %1205
    %1207 = vrot.lane.b32.xlu0 %v1128, 127
    %v1208 = vpop.permute.xlu0 %1207
    %1209 = vrot.lane.b32.xlu0 %v1130, 127
    %v1210 = vpop.permute.xlu0 %1209
    %1211 = vrot.lane.b32.xlu0 %v1132, 127
    %v1212 = vpop.permute.xlu0 %1211
    %1213 = vrot.lane.b32.xlu0 %v1134, 127
    %v1214 = vpop.permute.xlu0 %1213
    %1215 = vrot.lane.b32.xlu0 %v1136, 127
    %v1216 = vpop.permute.xlu0 %1215
    %1217 = vrot.lane.b32.xlu0 %v1138, 127
    %v1218 = vpop.permute.xlu0 %1217
    %1219 = vrot.lane.b32.xlu0 %v1140, 127
    %v1220 = vpop.permute.xlu0 %1219
    %1221 = vrot.lane.b32.xlu0 %v1142, 127
    %v1222 = vpop.permute.xlu0 %1221
    %1223 = vrot.lane.b32.xlu0 %v1144, 127
    %v1224 = vpop.permute.xlu0 %1223
    %1225 = vrot.lane.b32.xlu0 %v1146, 127
    %v1226 = vpop.permute.xlu0 %1225
    %1227 = vrot.lane.b32.xlu0 %v1148, 127
    %v1228 = vpop.permute.xlu0 %1227
    %1229 = vrot.lane.b32.xlu0 %v1150, 127
    %v1230 = vpop.permute.xlu0 %1229
    %1231 = vrot.lane.b32.xlu0 %v1152, 127
    %v1232 = vpop.permute.xlu0 %1231
    %1233 = vrot.lane.b32.xlu0 %v1154, 127
    %v1234 = vpop.permute.xlu0 %1233
    %1235 = vrot.lane.b32.xlu0 %v1156, 127
    %v1236 = vpop.permute.xlu0 %1235
    %1237 = vrot.lane.b32.xlu0 %v1158, 127
    %v1238 = vpop.permute.xlu0 %1237
    %1239 = vrot.lane.b32.xlu0 %v1160, 127
    %v1240 = vpop.permute.xlu0 %1239
    %1241 = vrot.lane.b32.xlu0 %v1162, 127
    %v1242 = vpop.permute.xlu0 %1241
    %v1243 = vsel %vm518, %v1164, %v1204
    %v1244 = vsel %vm518, %v1166, %v1206
    %v1245 = vsel %vm518, %v1168, %v1208
    %v1246 = vsel %vm518, %v1170, %v1210
    %v1247 = vsel %vm518, %v1172, %v1212
    %v1248 = vsel %vm518, %v1174, %v1214
    %v1249 = vsel %vm518, %v1176, %v1216
    %v1250 = vsel %vm518, %v1178, %v1218
    %v1251 = vsel %vm518, %v1180, %v1220
    %v1252 = vsel %vm518, %v1182, %v1222
    %v1253 = vsel %vm518, %v1184, %v1224
    %v1254 = vsel %vm518, %v1186, %v1226
    %v1255 = vsel %vm518, %v1188, %v1228
    %v1256 = vsel %vm518, %v1190, %v1230
    %v1257 = vsel %vm518, %v1192, %v1232
    %v1258 = vsel %vm518, %v1194, %v1234
    %v1259 = vsel %vm518, %v1196, %v1236
    %v1260 = vsel %vm518, %v1198, %v1238
    %v1261 = vsel %vm518, %v1200, %v1240
    %v1262 = vsel %vm518, %v1202, %v1242
    %v1263 = vsel %vm518, %v1204, %v1164
    %v1264 = vsel %vm518, %v1206, %v1166
    %v1265 = vsel %vm518, %v1208, %v1168
    %v1266 = vsel %vm518, %v1210, %v1170
    %v1267 = vsel %vm518, %v1212, %v1172
    %v1268 = vsel %vm518, %v1214, %v1174
    %v1269 = vsel %vm518, %v1216, %v1176
    %v1270 = vsel %vm518, %v1218, %v1178
    %v1271 = vsel %vm518, %v1220, %v1180
    %v1272 = vsel %vm518, %v1222, %v1182
    %v1273 = vsel %vm518, %v1224, %v1184
    %v1274 = vsel %vm518, %v1226, %v1186
    %v1275 = vsel %vm518, %v1228, %v1188
    %v1276 = vsel %vm518, %v1230, %v1190
    %v1277 = vsel %vm518, %v1232, %v1192
    %v1278 = vsel %vm518, %v1234, %v1194
    %v1279 = vsel %vm518, %v1236, %v1196
    %v1280 = vsel %vm518, %v1238, %v1198
    %v1281 = vsel %vm518, %v1240, %v1200
    %v1282 = vsel %vm518, %v1242, %v1202
    %1283 = vrot.lane.b32.xlu0 %v1123, 1
    %v1284 = vpop.permute.xlu0 %1283
    %1285 = vrot.lane.b32.xlu0 %v1125, 1
    %v1286 = vpop.permute.xlu0 %1285
    %1287 = vrot.lane.b32.xlu0 %v1127, 1
    %v1288 = vpop.permute.xlu0 %1287
    %1289 = vrot.lane.b32.xlu0 %v1129, 1
    %v1290 = vpop.permute.xlu0 %1289
    %1291 = vrot.lane.b32.xlu0 %v1131, 1
    %v1292 = vpop.permute.xlu0 %1291
    %1293 = vrot.lane.b32.xlu0 %v1133, 1
    %v1294 = vpop.permute.xlu0 %1293
    %1295 = vrot.lane.b32.xlu0 %v1135, 1
    %v1296 = vpop.permute.xlu0 %1295
    %1297 = vrot.lane.b32.xlu0 %v1137, 1
    %v1298 = vpop.permute.xlu0 %1297
    %1299 = vrot.lane.b32.xlu0 %v1139, 1
    %v1300 = vpop.permute.xlu0 %1299
    %1301 = vrot.lane.b32.xlu0 %v1141, 1
    %v1302 = vpop.permute.xlu0 %1301
    %1303 = vrot.lane.b32.xlu0 %v1143, 1
    %v1304 = vpop.permute.xlu0 %1303
    %1305 = vrot.lane.b32.xlu0 %v1145, 1
    %v1306 = vpop.permute.xlu0 %1305
    %1307 = vrot.lane.b32.xlu0 %v1147, 1
    %v1308 = vpop.permute.xlu0 %1307
    %1309 = vrot.lane.b32.xlu0 %v1149, 1
    %v1310 = vpop.permute.xlu0 %1309
    %1311 = vrot.lane.b32.xlu0 %v1151, 1
    %v1312 = vpop.permute.xlu0 %1311
    %1313 = vrot.lane.b32.xlu0 %v1153, 1
    %v1314 = vpop.permute.xlu0 %1313
    %1315 = vrot.lane.b32.xlu0 %v1155, 1
    %v1316 = vpop.permute.xlu0 %1315
    %1317 = vrot.lane.b32.xlu0 %v1157, 1
    %v1318 = vpop.permute.xlu0 %1317
    %1319 = vrot.lane.b32.xlu0 %v1159, 1
    %v1320 = vpop.permute.xlu0 %1319
    %1321 = vrot.lane.b32.xlu0 %v1161, 1
    %v1322 = vpop.permute.xlu0 %1321
    %1323 = vrot.lane.b32.xlu0 %v1124, 1
    %v1324 = vpop.permute.xlu0 %1323
    %1325 = vrot.lane.b32.xlu0 %v1126, 1
    %v1326 = vpop.permute.xlu0 %1325
    %1327 = vrot.lane.b32.xlu0 %v1128, 1
    %v1328 = vpop.permute.xlu0 %1327
    %1329 = vrot.lane.b32.xlu0 %v1130, 1
    %v1330 = vpop.permute.xlu0 %1329
    %1331 = vrot.lane.b32.xlu0 %v1132, 1
    %v1332 = vpop.permute.xlu0 %1331
    %1333 = vrot.lane.b32.xlu0 %v1134, 1
    %v1334 = vpop.permute.xlu0 %1333
    %1335 = vrot.lane.b32.xlu0 %v1136, 1
    %v1336 = vpop.permute.xlu0 %1335
    %1337 = vrot.lane.b32.xlu0 %v1138, 1
    %v1338 = vpop.permute.xlu0 %1337
    %1339 = vrot.lane.b32.xlu0 %v1140, 1
    %v1340 = vpop.permute.xlu0 %1339
    %1341 = vrot.lane.b32.xlu0 %v1142, 1
    %v1342 = vpop.permute.xlu0 %1341
    %1343 = vrot.lane.b32.xlu0 %v1144, 1
    %v1344 = vpop.permute.xlu0 %1343
    %1345 = vrot.lane.b32.xlu0 %v1146, 1
    %v1346 = vpop.permute.xlu0 %1345
    %1347 = vrot.lane.b32.xlu0 %v1148, 1
    %v1348 = vpop.permute.xlu0 %1347
    %1349 = vrot.lane.b32.xlu0 %v1150, 1
    %v1350 = vpop.permute.xlu0 %1349
    %1351 = vrot.lane.b32.xlu0 %v1152, 1
    %v1352 = vpop.permute.xlu0 %1351
    %1353 = vrot.lane.b32.xlu0 %v1154, 1
    %v1354 = vpop.permute.xlu0 %1353
    %1355 = vrot.lane.b32.xlu0 %v1156, 1
    %v1356 = vpop.permute.xlu0 %1355
    %1357 = vrot.lane.b32.xlu0 %v1158, 1
    %v1358 = vpop.permute.xlu0 %1357
    %1359 = vrot.lane.b32.xlu0 %v1160, 1
    %v1360 = vpop.permute.xlu0 %1359
    %1361 = vrot.lane.b32.xlu0 %v1162, 1
    %v1362 = vpop.permute.xlu0 %1361
    %v1363 = vsel %vm639, %v1284, %v1324
    %v1364 = vsel %vm639, %v1286, %v1326
    %v1365 = vsel %vm639, %v1288, %v1328
    %v1366 = vsel %vm639, %v1290, %v1330
    %v1367 = vsel %vm639, %v1292, %v1332
    %v1368 = vsel %vm639, %v1294, %v1334
    %v1369 = vsel %vm639, %v1296, %v1336
    %v1370 = vsel %vm639, %v1298, %v1338
    %v1371 = vsel %vm639, %v1300, %v1340
    %v1372 = vsel %vm639, %v1302, %v1342
    %v1373 = vsel %vm639, %v1304, %v1344
    %v1374 = vsel %vm639, %v1306, %v1346
    %v1375 = vsel %vm639, %v1308, %v1348
    %v1376 = vsel %vm639, %v1310, %v1350
    %v1377 = vsel %vm639, %v1312, %v1352
    %v1378 = vsel %vm639, %v1314, %v1354
    %v1379 = vsel %vm639, %v1316, %v1356
    %v1380 = vsel %vm639, %v1318, %v1358
    %v1381 = vsel %vm639, %v1320, %v1360
    %v1382 = vsel %vm639, %v1322, %v1362
    %v1383 = vsel %vm639, %v1324, %v1284
    %v1384 = vsel %vm639, %v1326, %v1286
    %v1385 = vsel %vm639, %v1328, %v1288
    %v1386 = vsel %vm639, %v1330, %v1290
    %v1387 = vsel %vm639, %v1332, %v1292
    %v1388 = vsel %vm639, %v1334, %v1294
    %v1389 = vsel %vm639, %v1336, %v1296
    %v1390 = vsel %vm639, %v1338, %v1298
    %v1391 = vsel %vm639, %v1340, %v1300
    %v1392 = vsel %vm639, %v1342, %v1302
    %v1393 = vsel %vm639, %v1344, %v1304
    %v1394 = vsel %vm639, %v1346, %v1306
    %v1395 = vsel %vm639, %v1348, %v1308
    %v1396 = vsel %vm639, %v1350, %v1310
    %v1397 = vsel %vm639, %v1352, %v1312
    %v1398 = vsel %vm639, %v1354, %v1314
    %v1399 = vsel %vm639, %v1356, %v1316
    %v1400 = vsel %vm639, %v1358, %v1318
    %v1401 = vsel %vm639, %v1360, %v1320
    %v1402 = vsel %vm639, %v1362, %v1322
    %v1403 = vsel %vm388, %v1243, %v1383
    %v1404 = vsel %vm389, %v1263, %v1363
    %v1405 = vsel %vm388, %v1244, %v1384
    %v1406 = vsel %vm389, %v1264, %v1364
    %v1407 = vsel %vm388, %v1245, %v1385
    %v1408 = vsel %vm389, %v1265, %v1365
    %v1409 = vsel %vm388, %v1246, %v1386
    %v1410 = vsel %vm389, %v1266, %v1366
    %v1411 = vsel %vm388, %v1247, %v1387
    %v1412 = vsel %vm389, %v1267, %v1367
    %v1413 = vsel %vm388, %v1248, %v1388
    %v1414 = vsel %vm389, %v1268, %v1368
    %v1415 = vsel %vm388, %v1249, %v1389
    %v1416 = vsel %vm389, %v1269, %v1369
    %v1417 = vsel %vm388, %v1250, %v1390
    %v1418 = vsel %vm389, %v1270, %v1370
    %v1419 = vsel %vm388, %v1251, %v1391
    %v1420 = vsel %vm389, %v1271, %v1371
    %v1421 = vsel %vm388, %v1252, %v1392
    %v1422 = vsel %vm389, %v1272, %v1372
    %v1423 = vsel %vm388, %v1253, %v1393
    %v1424 = vsel %vm389, %v1273, %v1373
    %v1425 = vsel %vm388, %v1254, %v1394
    %v1426 = vsel %vm389, %v1274, %v1374
    %v1427 = vsel %vm388, %v1255, %v1395
    %v1428 = vsel %vm389, %v1275, %v1375
    %v1429 = vsel %vm388, %v1256, %v1396
    %v1430 = vsel %vm389, %v1276, %v1376
    %v1431 = vsel %vm388, %v1257, %v1397
    %v1432 = vsel %vm389, %v1277, %v1377
    %v1433 = vsel %vm388, %v1258, %v1398
    %v1434 = vsel %vm389, %v1278, %v1378
    %v1435 = vsel %vm388, %v1259, %v1399
    %v1436 = vsel %vm389, %v1279, %v1379
    %v1437 = vsel %vm388, %v1260, %v1400
    %v1438 = vsel %vm389, %v1280, %v1380
    %v1439 = vsel %vm388, %v1261, %v1401
    %v1440 = vsel %vm389, %v1281, %v1381
    %v1441 = vsel %vm388, %v1262, %v1402
    %v1442 = vsel %vm389, %v1282, %v1382
    %v1443 = vadd.f32 %v1123, %v1403
    %v1444 = vadd.f32 %v1124, %v1404
    %v1445 = vadd.f32 %v1125, %v1405
    %v1446 = vadd.f32 %v1126, %v1406
    %v1447 = vadd.f32 %v1127, %v1407
    %v1448 = vadd.f32 %v1128, %v1408
    %v1449 = vadd.f32 %v1129, %v1409
    %v1450 = vadd.f32 %v1130, %v1410
    %v1451 = vadd.f32 %v1131, %v1411
    %v1452 = vadd.f32 %v1132, %v1412
    %v1453 = vadd.f32 %v1133, %v1413
    %v1454 = vadd.f32 %v1134, %v1414
    %v1455 = vadd.f32 %v1135, %v1415
    %v1456 = vadd.f32 %v1136, %v1416
    %v1457 = vadd.f32 %v1137, %v1417
    %v1458 = vadd.f32 %v1138, %v1418
    %v1459 = vadd.f32 %v1139, %v1419
    %v1460 = vadd.f32 %v1140, %v1420
    %v1461 = vadd.f32 %v1141, %v1421
    %v1462 = vadd.f32 %v1142, %v1422
    %v1463 = vadd.f32 %v1143, %v1423
    %v1464 = vadd.f32 %v1144, %v1424
    %v1465 = vadd.f32 %v1145, %v1425
    %v1466 = vadd.f32 %v1146, %v1426
    %v1467 = vadd.f32 %v1147, %v1427
    %v1468 = vadd.f32 %v1148, %v1428
    %v1469 = vadd.f32 %v1149, %v1429
    %v1470 = vadd.f32 %v1150, %v1430
    %v1471 = vadd.f32 %v1151, %v1431
    %v1472 = vadd.f32 %v1152, %v1432
    %v1473 = vadd.f32 %v1153, %v1433
    %v1474 = vadd.f32 %v1154, %v1434
    %v1475 = vadd.f32 %v1155, %v1435
    %v1476 = vadd.f32 %v1156, %v1436
    %v1477 = vadd.f32 %v1157, %v1437
    %v1478 = vadd.f32 %v1158, %v1438
    %v1479 = vadd.f32 %v1159, %v1439
    %v1480 = vadd.f32 %v1160, %v1440
    %v1481 = vadd.f32 %v1161, %v1441
    %v1482 = vadd.f32 %v1162, %v1442
    %v1483 = vrot.slane %v1443, 1
    %v1484 = vrot.slane %v1444, 1
    %v1485 = vrot.slane %v1445, 1
    %v1486 = vrot.slane %v1446, 1
    %v1487 = vrot.slane %v1447, 1
    %v1488 = vrot.slane %v1448, 1
    %v1489 = vrot.slane %v1449, 1
    %v1490 = vrot.slane %v1450, 1
    %v1491 = vrot.slane %v1451, 1
    %v1492 = vrot.slane %v1452, 1
    %v1493 = vrot.slane %v1453, 1
    %v1494 = vrot.slane %v1454, 1
    %v1495 = vrot.slane %v1455, 1
    %v1496 = vrot.slane %v1456, 1
    %v1497 = vrot.slane %v1457, 1
    %v1498 = vrot.slane %v1458, 1
    %v1499 = vrot.slane %v1459, 1
    %v1500 = vrot.slane %v1460, 1
    %v1501 = vrot.slane %v1461, 1
    %v1502 = vrot.slane %v1462, 1
    %v1503 = vrot.slane %v1463, 1
    %v1504 = vrot.slane %v1464, 1
    %v1505 = vrot.slane %v1465, 1
    %v1506 = vrot.slane %v1466, 1
    %v1507 = vrot.slane %v1467, 1
    %v1508 = vrot.slane %v1468, 1
    %v1509 = vrot.slane %v1469, 1
    %v1510 = vrot.slane %v1470, 1
    %v1511 = vrot.slane %v1471, 1
    %v1512 = vrot.slane %v1472, 1
    %v1513 = vrot.slane %v1473, 1
    %v1514 = vrot.slane %v1474, 1
    %v1515 = vrot.slane %v1475, 1
    %v1516 = vrot.slane %v1476, 1
    %v1517 = vrot.slane %v1477, 1
    %v1518 = vrot.slane %v1478, 1
    %v1519 = vrot.slane %v1479, 1
    %v1520 = vrot.slane %v1480, 1
    %v1521 = vrot.slane %v1481, 1
    %v1522 = vrot.slane %v1482, 1
    %v1523 = vsel %vm800, %v1519, %v1521
    %v1524 = vsel %vm800, %v1520, %v1522
    %v1525 = vsel %vm800, %v1517, %v1519
    %v1526 = vsel %vm800, %v1518, %v1520
    %v1527 = vsel %vm800, %v1515, %v1517
    %v1528 = vsel %vm800, %v1516, %v1518
    %v1529 = vsel %vm800, %v1513, %v1515
    %v1530 = vsel %vm800, %v1514, %v1516
    %v1531 = vsel %vm800, %v1511, %v1513
    %v1532 = vsel %vm800, %v1512, %v1514
    %v1533 = vsel %vm800, %v1509, %v1511
    %v1534 = vsel %vm800, %v1510, %v1512
    %v1535 = vsel %vm800, %v1507, %v1509
    %v1536 = vsel %vm800, %v1508, %v1510
    %v1537 = vsel %vm800, %v1505, %v1507
    %v1538 = vsel %vm800, %v1506, %v1508
    %v1539 = vsel %vm800, %v1503, %v1505
    %v1540 = vsel %vm800, %v1504, %v1506
    %v1541 = vsel %vm800, %v1501, %v1503
    %v1542 = vsel %vm800, %v1502, %v1504
    %v1543 = vsel %vm800, %v1499, %v1501
    %v1544 = vsel %vm800, %v1500, %v1502
    %v1545 = vsel %vm800, %v1497, %v1499
    %v1546 = vsel %vm800, %v1498, %v1500
    %v1547 = vsel %vm800, %v1495, %v1497
    %v1548 = vsel %vm800, %v1496, %v1498
    %v1549 = vsel %vm800, %v1493, %v1495
    %v1550 = vsel %vm800, %v1494, %v1496
    %v1551 = vsel %vm800, %v1491, %v1493
    %v1552 = vsel %vm800, %v1492, %v1494
    %v1553 = vsel %vm800, %v1489, %v1491
    %v1554 = vsel %vm800, %v1490, %v1492
    %v1555 = vsel %vm800, %v1487, %v1489
    %v1556 = vsel %vm800, %v1488, %v1490
    %v1557 = vsel %vm800, %v1485, %v1487
    %v1558 = vsel %vm800, %v1486, %v1488
    %v1559 = vsel %vm800, %v1483, %v1485
    %v1560 = vsel %vm800, %v1484, %v1486
    %v1561 = vsel %vm800, %v1521, %v1483
    %v1562 = vsel %vm800, %v1522, %v1484
    %v1563 = vrot.slane %v1443, 7
    %v1564 = vrot.slane %v1444, 7
    %v1565 = vrot.slane %v1445, 7
    %v1566 = vrot.slane %v1446, 7
    %v1567 = vrot.slane %v1447, 7
    %v1568 = vrot.slane %v1448, 7
    %v1569 = vrot.slane %v1449, 7
    %v1570 = vrot.slane %v1450, 7
    %v1571 = vrot.slane %v1451, 7
    %v1572 = vrot.slane %v1452, 7
    %v1573 = vrot.slane %v1453, 7
    %v1574 = vrot.slane %v1454, 7
    %v1575 = vrot.slane %v1455, 7
    %v1576 = vrot.slane %v1456, 7
    %v1577 = vrot.slane %v1457, 7
    %v1578 = vrot.slane %v1458, 7
    %v1579 = vrot.slane %v1459, 7
    %v1580 = vrot.slane %v1460, 7
    %v1581 = vrot.slane %v1461, 7
    %v1582 = vrot.slane %v1462, 7
    %v1583 = vrot.slane %v1463, 7
    %v1584 = vrot.slane %v1464, 7
    %v1585 = vrot.slane %v1465, 7
    %v1586 = vrot.slane %v1466, 7
    %v1587 = vrot.slane %v1467, 7
    %v1588 = vrot.slane %v1468, 7
    %v1589 = vrot.slane %v1469, 7
    %v1590 = vrot.slane %v1470, 7
    %v1591 = vrot.slane %v1471, 7
    %v1592 = vrot.slane %v1472, 7
    %v1593 = vrot.slane %v1473, 7
    %v1594 = vrot.slane %v1474, 7
    %v1595 = vrot.slane %v1475, 7
    %v1596 = vrot.slane %v1476, 7
    %v1597 = vrot.slane %v1477, 7
    %v1598 = vrot.slane %v1478, 7
    %v1599 = vrot.slane %v1479, 7
    %v1600 = vrot.slane %v1480, 7
    %v1601 = vrot.slane %v1481, 7
    %v1602 = vrot.slane %v1482, 7
    %v1603 = vsel %vm881, %v1599, %v1601
    %v1604 = vsel %vm881, %v1600, %v1602
    %v1605 = vsel %vm881, %v1597, %v1599
    %v1606 = vsel %vm881, %v1598, %v1600
    %v1607 = vsel %vm881, %v1595, %v1597
    %v1608 = vsel %vm881, %v1596, %v1598
    %v1609 = vsel %vm881, %v1593, %v1595
    %v1610 = vsel %vm881, %v1594, %v1596
    %v1611 = vsel %vm881, %v1591, %v1593
    %v1612 = vsel %vm881, %v1592, %v1594
    %v1613 = vsel %vm881, %v1589, %v1591
    %v1614 = vsel %vm881, %v1590, %v1592
    %v1615 = vsel %vm881, %v1587, %v1589
    %v1616 = vsel %vm881, %v1588, %v1590
    %v1617 = vsel %vm881, %v1585, %v1587
    %v1618 = vsel %vm881, %v1586, %v1588
    %v1619 = vsel %vm881, %v1583, %v1585
    %v1620 = vsel %vm881, %v1584, %v1586
    %v1621 = vsel %vm881, %v1581, %v1583
    %v1622 = vsel %vm881, %v1582, %v1584
    %v1623 = vsel %vm881, %v1579, %v1581
    %v1624 = vsel %vm881, %v1580, %v1582
    %v1625 = vsel %vm881, %v1577, %v1579
    %v1626 = vsel %vm881, %v1578, %v1580
    %v1627 = vsel %vm881, %v1575, %v1577
    %v1628 = vsel %vm881, %v1576, %v1578
    %v1629 = vsel %vm881, %v1573, %v1575
    %v1630 = vsel %vm881, %v1574, %v1576
    %v1631 = vsel %vm881, %v1571, %v1573
    %v1632 = vsel %vm881, %v1572, %v1574
    %v1633 = vsel %vm881, %v1569, %v1571
    %v1634 = vsel %vm881, %v1570, %v1572
    %v1635 = vsel %vm881, %v1567, %v1569
    %v1636 = vsel %vm881, %v1568, %v1570
    %v1637 = vsel %vm881, %v1565, %v1567
    %v1638 = vsel %vm881, %v1566, %v1568
    %v1639 = vsel %vm881, %v1563, %v1565
    %v1640 = vsel %vm881, %v1564, %v1566
    %v1641 = vsel %vm881, %v1601, %v1563
    %v1642 = vsel %vm881, %v1602, %v1564
    %v1643 = vsel %vm344, %v1559, %v1641
    %v1644 = vsel %vm344, %v1560, %v1642
    %v1645 = vsel %vm345, %v1557, %v1639
    %v1646 = vsel %vm345, %v1558, %v1640
    %v1647 = vsel %vm346, %v1555, %v1637
    %v1648 = vsel %vm346, %v1556, %v1638
    %v1649 = vsel %vm347, %v1553, %v1635
    %v1650 = vsel %vm347, %v1554, %v1636
    %v1651 = vsel %vm348, %v1551, %v1633
    %v1652 = vsel %vm348, %v1552, %v1634
    %v1653 = vsel %vm349, %v1549, %v1631
    %v1654 = vsel %vm349, %v1550, %v1632
    %v1655 = vsel %vm350, %v1547, %v1629
    %v1656 = vsel %vm350, %v1548, %v1630
    %v1657 = vsel %vm351, %v1545, %v1627
    %v1658 = vsel %vm351, %v1546, %v1628
    %v1659 = vsel %vm352, %v1543, %v1625
    %v1660 = vsel %vm352, %v1544, %v1626
    %v1661 = vsel %vm353, %v1541, %v1623
    %v1662 = vsel %vm353, %v1542, %v1624
    %v1663 = vsel %vm354, %v1539, %v1621
    %v1664 = vsel %vm354, %v1540, %v1622
    %v1665 = vsel %vm355, %v1537, %v1619
    %v1666 = vsel %vm355, %v1538, %v1620
    %v1667 = vsel %vm356, %v1535, %v1617
    %v1668 = vsel %vm356, %v1536, %v1618
    %v1669 = vsel %vm357, %v1533, %v1615
    %v1670 = vsel %vm357, %v1534, %v1616
    %v1671 = vsel %vm358, %v1531, %v1613
    %v1672 = vsel %vm358, %v1532, %v1614
    %v1673 = vsel %vm359, %v1529, %v1611
    %v1674 = vsel %vm359, %v1530, %v1612
    %v1675 = vsel %vm360, %v1527, %v1609
    %v1676 = vsel %vm360, %v1528, %v1610
    %v1677 = vsel %vm361, %v1525, %v1607
    %v1678 = vsel %vm361, %v1526, %v1608
    %v1679 = vsel %vm362, %v1523, %v1605
    %v1680 = vsel %vm362, %v1524, %v1606
    %v1681 = vsel %vm363, %v1561, %v1603
    %v1682 = vsel %vm363, %v1562, %v1604
    %v1683 = vadd.f32 %v1443, %v1643
    %v1684 = vadd.f32 %v1444, %v1644
    %v1685 = vadd.f32 %v1445, %v1645
    %v1686 = vadd.f32 %v1446, %v1646
    %v1687 = vadd.f32 %v1447, %v1647
    %v1688 = vadd.f32 %v1448, %v1648
    %v1689 = vadd.f32 %v1449, %v1649
    %v1690 = vadd.f32 %v1450, %v1650
    %v1691 = vadd.f32 %v1451, %v1651
    %v1692 = vadd.f32 %v1452, %v1652
    %v1693 = vadd.f32 %v1453, %v1653
    %v1694 = vadd.f32 %v1454, %v1654
    %v1695 = vadd.f32 %v1455, %v1655
    %v1696 = vadd.f32 %v1456, %v1656
    %v1697 = vadd.f32 %v1457, %v1657
    %v1698 = vadd.f32 %v1458, %v1658
    %v1699 = vadd.f32 %v1459, %v1659
    %v1700 = vadd.f32 %v1460, %v1660
    %v1701 = vadd.f32 %v1461, %v1661
    %v1702 = vadd.f32 %v1462, %v1662
    %v1703 = vadd.f32 %v1463, %v1663
    %v1704 = vadd.f32 %v1464, %v1664
    %v1705 = vadd.f32 %v1465, %v1665
    %v1706 = vadd.f32 %v1466, %v1666
    %v1707 = vadd.f32 %v1467, %v1667
    %v1708 = vadd.f32 %v1468, %v1668
    %v1709 = vadd.f32 %v1469, %v1669
    %v1710 = vadd.f32 %v1470, %v1670
    %v1711 = vadd.f32 %v1471, %v1671
    %v1712 = vadd.f32 %v1472, %v1672
    %v1713 = vadd.f32 %v1473, %v1673
    %v1714 = vadd.f32 %v1474, %v1674
    %v1715 = vadd.f32 %v1475, %v1675
    %v1716 = vadd.f32 %v1476, %v1676
    %v1717 = vadd.f32 %v1477, %v1677
    %v1718 = vadd.f32 %v1478, %v1678
    %v1719 = vadd.f32 %v1479, %v1679
    %v1720 = vadd.f32 %v1480, %v1680
    %v1721 = vadd.f32 %v1481, %v1681
    %v1722 = vadd.f32 %v1482, %v1682
    %v1723 = vmul.f32 %v40, %v1683
    %v1724 = vmul.f32 %v41, %v1684
    %v1725 = vmul.f32 %v42, %v1685
    %v1726 = vmul.f32 %v43, %v1686
    %v1727 = vmul.f32 %v44, %v1687
    %v1728 = vmul.f32 %v45, %v1688
    %v1729 = vmul.f32 %v46, %v1689
    %v1730 = vmul.f32 %v47, %v1690
    %v1731 = vmul.f32 %v48, %v1691
    %v1732 = vmul.f32 %v49, %v1692
    %v1733 = vmul.f32 %v50, %v1693
    %v1734 = vmul.f32 %v51, %v1694
    %v1735 = vmul.f32 %v52, %v1695
    %v1736 = vmul.f32 %v53, %v1696
    %v1737 = vmul.f32 %v54, %v1697
    %v1738 = vmul.f32 %v55, %v1698
    %v1739 = vmul.f32 %v56, %v1699
    %v1740 = vmul.f32 %v57, %v1700
    %v1741 = vmul.f32 %v58, %v1701
    %v1742 = vmul.f32 %v59, %v1702
    %v1743 = vmul.f32 %v60, %v1703
    %v1744 = vmul.f32 %v61, %v1704
    %v1745 = vmul.f32 %v62, %v1705
    %v1746 = vmul.f32 %v63, %v1706
    %v1747 = vmul.f32 %v64, %v1707
    %v1748 = vmul.f32 %v65, %v1708
    %v1749 = vmul.f32 %v66, %v1709
    %v1750 = vmul.f32 %v67, %v1710
    %v1751 = vmul.f32 %v68, %v1711
    %v1752 = vmul.f32 %v69, %v1712
    %v1753 = vmul.f32 %v70, %v1713
    %v1754 = vmul.f32 %v71, %v1714
    %v1755 = vmul.f32 %v72, %v1715
    %v1756 = vmul.f32 %v73, %v1716
    %v1757 = vmul.f32 %v74, %v1717
    %v1758 = vmul.f32 %v75, %v1718
    %v1759 = vmul.f32 %v76, %v1719
    %v1760 = vmul.f32 %v77, %v1720
    %v1761 = vmul.f32 %v78, %v1721
    %v1762 = vmul.f32 %v79, %v1722
    %v1763 = vadd.f32 %v1123, %v1723
    %v1764 = vadd.f32 %v1124, %v1724
    %v1765 = vadd.f32 %v1125, %v1725
    %v1766 = vadd.f32 %v1126, %v1726
    %v1767 = vadd.f32 %v1127, %v1727
    %v1768 = vadd.f32 %v1128, %v1728
    %v1769 = vadd.f32 %v1129, %v1729
    %v1770 = vadd.f32 %v1130, %v1730
    %v1771 = vadd.f32 %v1131, %v1731
    %v1772 = vadd.f32 %v1132, %v1732
    %v1773 = vadd.f32 %v1133, %v1733
    %v1774 = vadd.f32 %v1134, %v1734
    %v1775 = vadd.f32 %v1135, %v1735
    %v1776 = vadd.f32 %v1136, %v1736
    %v1777 = vadd.f32 %v1137, %v1737
    %v1778 = vadd.f32 %v1138, %v1738
    %v1779 = vadd.f32 %v1139, %v1739
    %v1780 = vadd.f32 %v1140, %v1740
    %v1781 = vadd.f32 %v1141, %v1741
    %v1782 = vadd.f32 %v1142, %v1742
    %v1783 = vadd.f32 %v1143, %v1743
    %v1784 = vadd.f32 %v1144, %v1744
    %v1785 = vadd.f32 %v1145, %v1745
    %v1786 = vadd.f32 %v1146, %v1746
    %v1787 = vadd.f32 %v1147, %v1747
    %v1788 = vadd.f32 %v1148, %v1748
    %v1789 = vadd.f32 %v1149, %v1749
    %v1790 = vadd.f32 %v1150, %v1750
    %v1791 = vadd.f32 %v1151, %v1751
    %v1792 = vadd.f32 %v1152, %v1752
    %v1793 = vadd.f32 %v1153, %v1753
    %v1794 = vadd.f32 %v1154, %v1754
    %v1795 = vadd.f32 %v1155, %v1755
    %v1796 = vadd.f32 %v1156, %v1756
    %v1797 = vadd.f32 %v1157, %v1757
    %v1798 = vadd.f32 %v1158, %v1758
    %v1799 = vadd.f32 %v1159, %v1759
    %v1800 = vadd.f32 %v1160, %v1760
    %v1801 = vadd.f32 %v1161, %v1761
    %v1802 = vadd.f32 %v1162, %v1762
    %s1803 = scalar_lea.vmem [#allocation7], 336
    %1804 = vst [vmem:[%s1803 + $0x10] sm:$0xff] %v1763
    %1805 = vst [vmem:[%s1803 + $0x18] sm:$0xff] %v1764
    %1806 = vst [vmem:[%s1803 + $0x20] sm:$0xff] %v1765
    %1807 = vst [vmem:[%s1803 + $0x28] sm:$0xff] %v1766
    %1808 = vst [vmem:[%s1803 + $0x30] sm:$0xff] %v1767
    %1809 = vst [vmem:[%s1803 + $0x38] sm:$0xff] %v1768
    %1810 = vst [vmem:[%s1803 + $0x40] sm:$0xff] %v1769
    %1811 = vst [vmem:[%s1803 + $0x48] sm:$0xff] %v1770
    %1812 = vst [vmem:[%s1803 + $0x50] sm:$0xff] %v1771
    %1813 = vst [vmem:[%s1803 + $0x58] sm:$0xff] %v1772
    %1814 = vst [vmem:[%s1803 + $0x60] sm:$0xff] %v1773
    %1815 = vst [vmem:[%s1803 + $0x68] sm:$0xff] %v1774
    %1816 = vst [vmem:[%s1803 + $0x70] sm:$0xff] %v1775
    %1817 = vst [vmem:[%s1803 + $0x78] sm:$0xff] %v1776
    %1818 = vst [vmem:[%s1803 + $0x80] sm:$0xff] %v1777
    %1819 = vst [vmem:[%s1803 + $0x88] sm:$0xff] %v1778
    %1820 = vst [vmem:[%s1803 + $0x90] sm:$0xff] %v1779
    %1821 = vst [vmem:[%s1803 + $0x98] sm:$0xff] %v1780
    %1822 = vst [vmem:[%s1803 + $0xa0] sm:$0xff] %v1781
    %1823 = vst [vmem:[%s1803 + $0xa8] sm:$0xff] %v1782
    %1824 = vst [vmem:[%s1803 + $0xb0] sm:$0xff] %v1783
    %1825 = vst [vmem:[%s1803 + $0xb8] sm:$0xff] %v1784
    %1826 = vst [vmem:[%s1803 + $0xc0] sm:$0xff] %v1785
    %1827 = vst [vmem:[%s1803 + $0xc8] sm:$0xff] %v1786
    %1828 = vst [vmem:[%s1803 + $0xd0] sm:$0xff] %v1787
    %1829 = vst [vmem:[%s1803 + $0xd8] sm:$0xff] %v1788
    %1830 = vst [vmem:[%s1803 + $0xe0] sm:$0xff] %v1789
    %1831 = vst [vmem:[%s1803 + $0xe8] sm:$0xff] %v1790
    %1832 = vst [vmem:[%s1803 + $0xf0] sm:$0xff] %v1791
    %1833 = vst [vmem:[%s1803 + $0xf8] sm:$0xff] %v1792
    %1834 = vst [vmem:[%s1803 + $0x100] sm:$0xff] %v1793
    %1835 = vst [vmem:[%s1803 + $0x108] sm:$0xff] %v1794
    %1836 = vst [vmem:[%s1803 + $0x110] sm:$0xff] %v1795
    %1837 = vst [vmem:[%s1803 + $0x118] sm:$0xff] %v1796
    %1838 = vst [vmem:[%s1803 + $0x120] sm:$0xff] %v1797
    %1839 = vst [vmem:[%s1803 + $0x128] sm:$0xff] %v1798
    %1840 = vst [vmem:[%s1803 + $0x130] sm:$0xff] %v1799
    %1841 = vst [vmem:[%s1803 + $0x138] sm:$0xff] %v1800
    %1842 = vst [vmem:[%s1803 + $0x140] sm:$0xff] %v1801
    %1843 = vst [vmem:[%s1803 + $0x148] sm:$0xff] %v1802
    // Predicated region
    $region18: #{tpu_custom_call.1} parent=1 // pred_check
      _
    $region19: #{tpu_custom_call.1} parent=1 // pred_check_branch
      %1845 = sbr.rel (0) target = $region21
    $region20: #{tpu_custom_call.1} parent=1 // pred_region
      %s1847 = ssub.s32 10752, 10752
      %1848 = vsyncadd [#allocation4], %s1847
      %s1849 = sshll.u32 [#allocation7], 4
      %s1850 = int_to_ptr.vmem [resolvable:$true] %s1849
      %1855 = dma.vmem_to_hbm [thread:$0]  %s1850, 10752, %s2, [#allocation4], 256, 256, 16
    $region21: #{tpu_custom_call.1} parent=1 // pred_fallthru
      _
    // Predicated region
    $region22: #{tpu_custom_call.1} parent=1 // pred_check
      _
    $region23: #{tpu_custom_call.1} parent=1 // pred_check_branch
      %1857 = sbr.rel (0) target = $region25
    $region24: #{tpu_custom_call.1} parent=1 // pred_region
      %1858 = dma.done [#allocation4], 10752
    $region25: #{tpu_custom_call.1} parent=1 // pred_fallthru
      _
    %1859 = vsyncpa [#allocation3], 1
    %1860 = vsyncpa [#allocation6], 1
    %1861 = vsyncpa [#allocation4], 1

</llo_original>
